<compile_context>
chip_gen: v6e
topology: v6e:2x2x1
jax: 0.10.0
libtpu: 0.0.40
codegen_flags: <defaults>
</compile_context>

<pallas_src>
import jax
import jax.numpy as jnp
from jax import lax
from jax.experimental import pallas as pl
from jax.experimental.pallas import tpu as pltpu


# ---------------------------------------------------------------------------
# Fused kernel: spectral filter (all graphs batched) + BN + ReLU + residual
# ---------------------------------------------------------------------------
def fused_eigval_kernel(evals_ref, evecs_ref, evecs_t_ref, feat_ref,
                        w0_ref, wr_ref, b_ref, out_ref,
                        sflat_ref, smat_ref, hf_ref):
    # evals: (G,E)  evecs: (G,N,E)  evecs_t: (G,E,N)  feat: (G,N,F)
    # w0: (E,EE)  wr: (max(k-1,1),EE,EE)  b: (k,EE)  out: (G, N*F)
    G, N, E = evecs_ref.shape
    F = feat_ref.shape[-1]
    k = b_ref.shape[0]

    evals = evals_ref[...]
    evecs = evecs_ref[...]
    evecs_t = evecs_t_ref[...]
    feat = feat_ref[...]
    b = b_ref[...]                       # (k, EE), loaded once (hoisted)

    # --- spectral filter chain (vec space), batched over all graphs --------
    # Step 0: vec(diag(evals)) @ W[0] folded into w0_eff (E, EE) in wrapper.
    s_flat = jnp.dot(evals, w0_ref[...],
                     preferred_element_type=jnp.float32) + b[0:1, :]
    if k > 1:
        s_flat = jnp.maximum(s_flat, 0.0)          # spectral_activation = relu
    for n in range(1, k):                           # k is static
        s_flat = jnp.dot(s_flat, wr_ref[n - 1],
                         preferred_element_type=jnp.float32) + b[n:n + 1, :]
        if n < k - 1:
            s_flat = jnp.maximum(s_flat, 0.0)

    # Unflatten s_flat (G, E*E) -> (G, E, E) via ref-slice copies (no value
    # reshape).  The last W/b columns were permuted in the wrapper so this is
    # already the TRANSPOSED filter: smat[g, i, e] == s[g, e, i].
    sflat_ref[...] = s_flat
    for i in range(E):
        smat_ref[:, i, :] = sflat_ref[:, i * E:(i + 1) * E]
    s_t = smat_ref[...]                              # (G, E, E) = s^T

    # --- eigen projection h = V (s^T (V^T X)); all contractions MXU-native -
    t1 = lax.dot_general(evecs_t, feat, (((2,), (1,)), ((0,), (0,))),
                         preferred_element_type=jnp.float32)   # (G,E,F) = V^T X
    t2 = lax.dot_general(s_t, t1, (((2,), (1,)), ((0,), (0,))),
                         preferred_element_type=jnp.float32)   # (G,E,F) = s^T t1
    h = lax.dot_general(evecs, t2, (((2,), (1,)), ((0,), (0,))),
                        preferred_element_type=jnp.float32)    # (G,N,F) = V t2

    # --- BatchNorm1d (training-mode batch stats, gamma=1, beta=0) + ReLU ---
    mean = jnp.mean(h, axis=(0, 1), keepdims=True)
    var = jnp.mean((h - mean) ** 2, axis=(0, 1), keepdims=True)
    h = (h - mean) * lax.rsqrt(var + 1e-5)
    h = jnp.maximum(h, 0.0)

    # residual connection; dropout p=0.0 -> identity
    hf_ref[...] = feat + h

    # --- lane-dense writeback: place (N, F) node blocks into a N*F lane slab
    for z in range(N):                    # static; ref slices always lower
        out_ref[:, z * F:(z + 1) * F] = hf_ref[:, z, :]


# ---------------------------------------------------------------------------
# Wrapper
# ---------------------------------------------------------------------------
def eigval_layer_forward(evals, evecs, feat, weights, biases):
    G, N, E = evecs.shape
    F_dim = feat.shape[-1]
    k = weights.shape[0]
    EE = E * E

    evals = evals.astype(jnp.float32)
    evecs = evecs.astype(jnp.float32)
    feat = feat.astype(jnp.float32)
    w_flat = weights.reshape(k, EE, EE).astype(jnp.float32)
    b_flat = biases.reshape(k, EE).astype(jnp.float32)

    # Fold vec(diag(evals)) @ W[0] into a pre-gathered (E, EE) weight:
    # w0_eff[i, :] = W_flat[0][i*(E+1), :]   (exact algebraic refactor).
    diag_rows = jnp.arange(E) * (E + 1)
    w0_eff = w_flat[0][diag_rows, :]                       # (E, EE)

    # Permute the LAST filter step's output columns (and its bias) so the
    # kernel's final s_flat is already s^T: col_perm[i*E + e] = e*E + i.
    col_perm = jnp.arange(EE).reshape(E, E).T.reshape(EE)
    if k == 1:
        w0_eff = w0_eff[:, col_perm]
        w_rest = jnp.zeros((1, EE, EE), jnp.float32)       # placeholder, unused
    else:
        w_rest = w_flat[1:]
        w_rest = w_rest.at[-1].set(w_rest[-1][:, col_perm])
    b_flat = b_flat.at[-1].set(b_flat[-1][col_perm])

    evecs_t = jnp.transpose(evecs, (0, 2, 1))              # (G, E, N)

    vmem = pltpu.MemorySpace.VMEM
    out = pl.pallas_call(
        fused_eigval_kernel,
        out_shape=jax.ShapeDtypeStruct((G, N * F_dim), jnp.float32),
        in_specs=[pl.BlockSpec(memory_space=vmem)] * 7,
        out_specs=pl.BlockSpec(memory_space=vmem),
        scratch_shapes=[
            pltpu.VMEM((G, EE), jnp.float32),       # s_flat staging
            pltpu.VMEM((G, E, E), jnp.float32),     # s^T matrix
            pltpu.VMEM((G, N, F_dim), jnp.float32), # feat + h staging
        ],
    )(evals, evecs, evecs_t, feat, w0_eff, w_rest, b_flat)

    # Free XLA view back to the PyTorch layout (G*N, F).
    return out.reshape(G * N, F_dim)


# ---------------------------------------------------------------------------
# Pure-JAX reference (mirrors the PyTorch forward, dense subtype)
# ---------------------------------------------------------------------------
def ref_forward(evals, evecs, feat, weights, biases):
    G = evecs.shape[0]
    k = weights.shape[0]
    outs = []
    for g in range(G):
        ev, V, X = evals[g], evecs[g], feat[g]
        s = jnp.diag(ev)
        for n in range(k):
            s = jnp.einsum('ijkl,ij->kl', weights[n], s) + biases[n]
            if n < k - 1:
                s = jnp.maximum(s, 0.0)
        outs.append(jnp.einsum('zi,ei,ne,nf->zf', V, s, V, X))
    h = jnp.concatenate(outs, axis=0)
    h_in = feat.reshape(-1, feat.shape[-1])
    mean = h.mean(axis=0, keepdims=True)
    var = ((h - mean) ** 2).mean(axis=0, keepdims=True)
    h = (h - mean) / jnp.sqrt(var + 1e-5)
    h = jnp.maximum(h, 0.0)
    return h_in + h


# ---------------------------------------------------------------------------
# Graph preprocessing (equivalent of _get_eigenvectors with defaults:
# unnormalized Laplacian, eigval_norm='', eigmod=None)
# ---------------------------------------------------------------------------
def make_graph_eigs(key, n_nodes, num_eigs):
    a = jax.random.bernoulli(key, 0.4, (n_nodes, n_nodes)).astype(jnp.float32)
    a = jnp.triu(a, 1)
    adj = a + a.T
    lap = jnp.diag(adj.sum(axis=1)) - adj
    evals, evecs = jnp.linalg.eigh(lap)            # ascending, like sorted torch.eig
    return evals[:num_eigs], evecs[:, :num_eigs]


if __name__ == "__main__":
    G = 2          # graphs in the batch
    N = 16         # nodes per graph
    E = 8          # num_eigs
    K = 2          # k (filter depth)
    F_dim = 8      # in_dim == out_dim (required for residual + BatchNorm1d(out_dim))

    key = jax.random.PRNGKey(0)
    k_feat, k_w, k_g0, k_g1 = jax.random.split(key, 4)

    # node features (what the layer calls `feature`), per graph
    feat = jax.random.normal(k_feat, (G, N, F_dim), dtype=jnp.float32)

    # parameters: k tensors of (E,E,E,E) ~ randn, biases zeros (per __init__, dense)
    weights = jax.random.normal(k_w, (K, E, E, E, E), dtype=jnp.float32)
    biases = jnp.zeros((K, E, E), dtype=jnp.float32)

    # eigen-decomposition of each graph Laplacian (cached preprocessing in PyTorch)
    ev0, V0 = make_graph_eigs(k_g0, N, E)
    ev1, V1 = make_graph_eigs(k_g1, N, E)
    evals = jnp.stack([ev0, ev1], axis=0)          # (G, E)
    evecs = jnp.stack([V0, V1], axis=0)            # (G, N, E)

    out = eigval_layer_forward(evals, evecs, feat, weights, biases)
    out = jax.block_until_ready(out)

    ref = ref_forward(evals, evecs, feat, weights, biases)
    assert out.shape == (G * N, F_dim)
    assert jnp.allclose(out, ref, atol=1e-3, rtol=1e-3), \
        f"max abs diff {jnp.max(jnp.abs(out - ref))}"

    print("KERNEL_OK")
</pallas_src>

<mosaic_0001>
module attributes {stable_mosaic.version = 11 : i64} {
  func.func @fused_eigval_kernel(%arg0: memref<2x8xf32, #tpu.memory_space<vmem>>, %arg1: memref<2x16x8xf32, #tpu.memory_space<vmem>>, %arg2: memref<2x8x16xf32, #tpu.memory_space<vmem>>, %arg3: memref<2x16x8xf32, #tpu.memory_space<vmem>>, %arg4: memref<8x64xf32, #tpu.memory_space<vmem>>, %arg5: memref<1x64x64xf32, #tpu.memory_space<vmem>>, %arg6: memref<2x64xf32, #tpu.memory_space<vmem>>, %arg7: memref<2x128xf32, #tpu.memory_space<vmem>>, %arg8: memref<2x64xf32, #tpu.memory_space<vmem>>, %arg9: memref<2x8x8xf32, #tpu.memory_space<vmem>>, %arg10: memref<2x16x8xf32, #tpu.memory_space<vmem>>) attributes {dimension_semantics = [], scalar_prefetch = 0 : i64, scratch_operands = 3 : i64, tpu.core_type = #tpu.core_type<tc>} {
    %c0 = arith.constant 0 : index
    %c0_0 = arith.constant 0 : index
    %0 = vector.load %arg0[%c0, %c0_0] : memref<2x8xf32, #tpu.memory_space<vmem>>, vector<2x8xf32>
    %c0_1 = arith.constant 0 : index
    %c0_2 = arith.constant 0 : index
    %c0_3 = arith.constant 0 : index
    %1 = vector.load %arg1[%c0_1, %c0_2, %c0_3] : memref<2x16x8xf32, #tpu.memory_space<vmem>>, vector<2x16x8xf32>
    %c0_4 = arith.constant 0 : index
    %c0_5 = arith.constant 0 : index
    %c0_6 = arith.constant 0 : index
    %2 = vector.load %arg2[%c0_4, %c0_5, %c0_6] : memref<2x8x16xf32, #tpu.memory_space<vmem>>, vector<2x8x16xf32>
    %c0_7 = arith.constant 0 : index
    %c0_8 = arith.constant 0 : index
    %c0_9 = arith.constant 0 : index
    %3 = vector.load %arg3[%c0_7, %c0_8, %c0_9] : memref<2x16x8xf32, #tpu.memory_space<vmem>>, vector<2x16x8xf32>
    %c0_10 = arith.constant 0 : index
    %c0_11 = arith.constant 0 : index
    %4 = vector.load %arg6[%c0_10, %c0_11] : memref<2x64xf32, #tpu.memory_space<vmem>>, vector<2x64xf32>
    %c0_12 = arith.constant 0 : index
    %c0_13 = arith.constant 0 : index
    %5 = vector.load %arg4[%c0_12, %c0_13] : memref<8x64xf32, #tpu.memory_space<vmem>>, vector<8x64xf32>
    %cst = arith.constant dense<0.000000e+00> : vector<2x64xf32>
    %6 = tpu.matmul %0, %5, %cst {dimension_numbers = #tpu.dot_dimension_numbers<[1], [0], [0], [1], [0, 0, 1, 1], [], []>} : vector<2x8xf32>, vector<8x64xf32>, vector<2x64xf32> -> vector<2x64xf32>
    %7 = vector.extract_strided_slice %4 {offsets = [0, 0], sizes = [1, 64], strides = [1, 1]} : vector<2x64xf32> to vector<1x64xf32>
    %8 = vector.broadcast %7 : vector<1x64xf32> to vector<2x64xf32>
    %9 = arith.addf %6, %8 : vector<2x64xf32>
    %cst_14 = arith.constant 0.000000e+00 : f32
    %10 = vector.broadcast %cst_14 : f32 to vector<2x64xf32>
    %11 = arith.maximumf %9, %10 : vector<2x64xf32>
    %c0_15 = arith.constant 0 : index
    %c0_16 = arith.constant 0 : index
    %c0_17 = arith.constant 0 : index
    %12 = vector.load %arg5[%c0_15, %c0_16, %c0_17] : memref<1x64x64xf32, #tpu.memory_space<vmem>>, vector<1x64x64xf32>
    %13 = vector.shape_cast %12 : vector<1x64x64xf32> to vector<64x64xf32>
    %cst_18 = arith.constant dense<0.000000e+00> : vector<2x64xf32>
    %14 = tpu.matmul %11, %13, %cst_18 {dimension_numbers = #tpu.dot_dimension_numbers<[1], [0], [0], [1], [0, 0, 1, 1], [], []>} : vector<2x64xf32>, vector<64x64xf32>, vector<2x64xf32> -> vector<2x64xf32>
    %15 = vector.extract_strided_slice %4 {offsets = [1, 0], sizes = [1, 64], strides = [1, 1]} : vector<2x64xf32> to vector<1x64xf32>
    %16 = vector.broadcast %15 : vector<1x64xf32> to vector<2x64xf32>
    %17 = arith.addf %14, %16 : vector<2x64xf32>
    %c0_19 = arith.constant 0 : index
    %c0_20 = arith.constant 0 : index
    %18 = vector.load %arg8[%c0_19, %c0_20] : memref<2x64xf32, #tpu.memory_space<vmem>>, vector<2x64xf32>
    tpu.vector_store %arg8[%c0_19, %c0_20], %17 {strides = array<i32>} : memref<2x64xf32, #tpu.memory_space<vmem>>, vector<2x64xf32>,
    %c0_21 = arith.constant 0 : index
    %c0_22 = arith.constant 0 : index
    %19 = vector.load %arg8[%c0_21, %c0_22] : memref<2x64xf32, #tpu.memory_space<vmem>>, vector<2x8xf32>
    %c0_23 = arith.constant 0 : index
    %c0_24 = arith.constant 0 : index
    %c0_25 = arith.constant 0 : index
    %20 = vector.load %arg9[%c0_23, %c0_24, %c0_25] : memref<2x8x8xf32, #tpu.memory_space<vmem>>, vector<2x1x8xf32>
    %21 = vector.shape_cast %20 : vector<2x1x8xf32> to vector<2x8xf32>
    %22 = vector.shape_cast %19 : vector<2x8xf32> to vector<2x1x8xf32>
    tpu.vector_store %arg9[%c0_23, %c0_24, %c0_25], %22 {strides = array<i32>} : memref<2x8x8xf32, #tpu.memory_space<vmem>>, vector<2x1x8xf32>,
    %c0_26 = arith.constant 0 : index
    %c8 = arith.constant 8 : index
    %23 = vector.load %arg8[%c0_26, %c8] : memref<2x64xf32, #tpu.memory_space<vmem>>, vector<2x8xf32>
    %c0_27 = arith.constant 0 : index
    %c1 = arith.constant 1 : index
    %c0_28 = arith.constant 0 : index
    %24 = vector.load %arg9[%c0_27, %c1, %c0_28] : memref<2x8x8xf32, #tpu.memory_space<vmem>>, vector<2x1x8xf32>
    %25 = vector.shape_cast %24 : vector<2x1x8xf32> to vector<2x8xf32>
    %26 = vector.shape_cast %23 : vector<2x8xf32> to vector<2x1x8xf32>
    tpu.vector_store %arg9[%c0_27, %c1, %c0_28], %26 {strides = array<i32>} : memref<2x8x8xf32, #tpu.memory_space<vmem>>, vector<2x1x8xf32>,
    %c0_29 = arith.constant 0 : index
    %c16 = arith.constant 16 : index
    %27 = vector.load %arg8[%c0_29, %c16] : memref<2x64xf32, #tpu.memory_space<vmem>>, vector<2x8xf32>
    %c0_30 = arith.constant 0 : index
    %c2 = arith.constant 2 : index
    %c0_31 = arith.constant 0 : index
    %28 = vector.load %arg9[%c0_30, %c2, %c0_31] : memref<2x8x8xf32, #tpu.memory_space<vmem>>, vector<2x1x8xf32>
    %29 = vector.shape_cast %28 : vector<2x1x8xf32> to vector<2x8xf32>
    %30 = vector.shape_cast %27 : vector<2x8xf32> to vector<2x1x8xf32>
    tpu.vector_store %arg9[%c0_30, %c2, %c0_31], %30 {strides = array<i32>} : memref<2x8x8xf32, #tpu.memory_space<vmem>>, vector<2x1x8xf32>,
    %c0_32 = arith.constant 0 : index
    %c24 = arith.constant 24 : index
    %31 = vector.load %arg8[%c0_32, %c24] : memref<2x64xf32, #tpu.memory_space<vmem>>, vector<2x8xf32>
    %c0_33 = arith.constant 0 : index
    %c3 = arith.constant 3 : index
    %c0_34 = arith.constant 0 : index
    %32 = vector.load %arg9[%c0_33, %c3, %c0_34] : memref<2x8x8xf32, #tpu.memory_space<vmem>>, vector<2x1x8xf32>
    %33 = vector.shape_cast %32 : vector<2x1x8xf32> to vector<2x8xf32>
    %34 = vector.shape_cast %31 : vector<2x8xf32> to vector<2x1x8xf32>
    tpu.vector_store %arg9[%c0_33, %c3, %c0_34], %34 {strides = array<i32>} : memref<2x8x8xf32, #tpu.memory_space<vmem>>, vector<2x1x8xf32>,
    %c0_35 = arith.constant 0 : index
    %c32 = arith.constant 32 : index
    %35 = vector.load %arg8[%c0_35, %c32] : memref<2x64xf32, #tpu.memory_space<vmem>>, vector<2x8xf32>
    %c0_36 = arith.constant 0 : index
    %c4 = arith.constant 4 : index
    %c0_37 = arith.constant 0 : index
    %36 = vector.load %arg9[%c0_36, %c4, %c0_37] : memref<2x8x8xf32, #tpu.memory_space<vmem>>, vector<2x1x8xf32>
    %37 = vector.shape_cast %36 : vector<2x1x8xf32> to vector<2x8xf32>
    %38 = vector.shape_cast %35 : vector<2x8xf32> to vector<2x1x8xf32>
    tpu.vector_store %arg9[%c0_36, %c4, %c0_37], %38 {strides = array<i32>} : memref<2x8x8xf32, #tpu.memory_space<vmem>>, vector<2x1x8xf32>,
    %c0_38 = arith.constant 0 : index
    %c40 = arith.constant 40 : index
    %39 = vector.load %arg8[%c0_38, %c40] : memref<2x64xf32, #tpu.memory_space<vmem>>, vector<2x8xf32>
    %c0_39 = arith.constant 0 : index
    %c5 = arith.constant 5 : index
    %c0_40 = arith.constant 0 : index
    %40 = vector.load %arg9[%c0_39, %c5, %c0_40] : memref<2x8x8xf32, #tpu.memory_space<vmem>>, vector<2x1x8xf32>
    %41 = vector.shape_cast %40 : vector<2x1x8xf32> to vector<2x8xf32>
    %42 = vector.shape_cast %39 : vector<2x8xf32> to vector<2x1x8xf32>
    tpu.vector_store %arg9[%c0_39, %c5, %c0_40], %42 {strides = array<i32>} : memref<2x8x8xf32, #tpu.memory_space<vmem>>, vector<2x1x8xf32>,
    %c0_41 = arith.constant 0 : index
    %c48 = arith.constant 48 : index
    %43 = vector.load %arg8[%c0_41, %c48] : memref<2x64xf32, #tpu.memory_space<vmem>>, vector<2x8xf32>
    %c0_42 = arith.constant 0 : index
    %c6 = arith.constant 6 : index
    %c0_43 = arith.constant 0 : index
    %44 = vector.load %arg9[%c0_42, %c6, %c0_43] : memref<2x8x8xf32, #tpu.memory_space<vmem>>, vector<2x1x8xf32>
    %45 = vector.shape_cast %44 : vector<2x1x8xf32> to vector<2x8xf32>
    %46 = vector.shape_cast %43 : vector<2x8xf32> to vector<2x1x8xf32>
    tpu.vector_store %arg9[%c0_42, %c6, %c0_43], %46 {strides = array<i32>} : memref<2x8x8xf32, #tpu.memory_space<vmem>>, vector<2x1x8xf32>,
    %c0_44 = arith.constant 0 : index
    %c56 = arith.constant 56 : index
    %47 = vector.load %arg8[%c0_44, %c56] : memref<2x64xf32, #tpu.memory_space<vmem>>, vector<2x8xf32>
    %c0_45 = arith.constant 0 : index
    %c7 = arith.constant 7 : index
    %c0_46 = arith.constant 0 : index
    %48 = vector.load %arg9[%c0_45, %c7, %c0_46] : memref<2x8x8xf32, #tpu.memory_space<vmem>>, vector<2x1x8xf32>
    %49 = vector.shape_cast %48 : vector<2x1x8xf32> to vector<2x8xf32>
    %50 = vector.shape_cast %47 : vector<2x8xf32> to vector<2x1x8xf32>
    tpu.vector_store %arg9[%c0_45, %c7, %c0_46], %50 {strides = array<i32>} : memref<2x8x8xf32, #tpu.memory_space<vmem>>, vector<2x1x8xf32>,
    %c0_47 = arith.constant 0 : index
    %c0_48 = arith.constant 0 : index
    %c0_49 = arith.constant 0 : index
    %51 = vector.load %arg9[%c0_47, %c0_48, %c0_49] : memref<2x8x8xf32, #tpu.memory_space<vmem>>, vector<2x8x8xf32>
    %cst_50 = arith.constant dense<0.000000e+00> : vector<2x8x8xf32>
    %52 = tpu.matmul %2, %3, %cst_50 {dimension_numbers = #tpu.dot_dimension_numbers<[2], [1], [1], [2], [0, 0, 0, 1, 1, 2], [0], [0]>} : vector<2x8x16xf32>, vector<2x16x8xf32>, vector<2x8x8xf32> -> vector<2x8x8xf32>
    %cst_51 = arith.constant dense<0.000000e+00> : vector<2x8x8xf32>
    %53 = tpu.matmul %51, %52, %cst_51 {dimension_numbers = #tpu.dot_dimension_numbers<[2], [1], [1], [2], [0, 0, 0, 1, 1, 2], [0], [0]>} : vector<2x8x8xf32>, vector<2x8x8xf32>, vector<2x8x8xf32> -> vector<2x8x8xf32>
    %cst_52 = arith.constant dense<0.000000e+00> : vector<2x16x8xf32>
    %54 = tpu.matmul %1, %53, %cst_52 {dimension_numbers = #tpu.dot_dimension_numbers<[2], [1], [1], [2], [0, 0, 0, 1, 1, 2], [0], [0]>} : vector<2x16x8xf32>, vector<2x8x8xf32>, vector<2x16x8xf32> -> vector<2x16x8xf32>
    %cst_53 = arith.constant dense<0.000000e+00> : vector<8xf32>
    %55 = vector.multi_reduction <add>, %54, %cst_53 [0, 1] : vector<2x16x8xf32> to vector<8xf32>
    %56 = vector.shape_cast %55 : vector<8xf32> to vector<1x1x8xf32>
    %cst_54 = arith.constant 3.200000e+01 : f32
    %57 = vector.broadcast %cst_54 : f32 to vector<1x1x8xf32>
    %58 = arith.divf %56, %57 : vector<1x1x8xf32>
    %59 = vector.broadcast %58 : vector<1x1x8xf32> to vector<2x16x8xf32>
    %60 = arith.subf %54, %59 : vector<2x16x8xf32>
    %61 = arith.mulf %60, %60 : vector<2x16x8xf32>
    %cst_55 = arith.constant dense<0.000000e+00> : vector<8xf32>
    %62 = vector.multi_reduction <add>, %61, %cst_55 [0, 1] : vector<2x16x8xf32> to vector<8xf32>
    %63 = vector.shape_cast %62 : vector<8xf32> to vector<1x1x8xf32>
    %cst_56 = arith.constant 3.200000e+01 : f32
    %64 = vector.broadcast %cst_56 : f32 to vector<1x1x8xf32>
    %65 = arith.divf %63, %64 : vector<1x1x8xf32>
    %66 = vector.broadcast %58 : vector<1x1x8xf32> to vector<2x16x8xf32>
    %67 = arith.subf %54, %66 : vector<2x16x8xf32>
    %cst_57 = arith.constant 9.99999974E-6 : f32
    %68 = vector.broadcast %cst_57 : f32 to vector<1x1x8xf32>
    %69 = arith.addf %65, %68 : vector<1x1x8xf32>
    %70 = math.rsqrt %69 : vector<1x1x8xf32>
    %71 = vector.broadcast %70 : vector<1x1x8xf32> to vector<2x16x8xf32>
    %72 = arith.mulf %67, %71 : vector<2x16x8xf32>
    %cst_58 = arith.constant 0.000000e+00 : f32
    %73 = vector.broadcast %cst_58 : f32 to vector<2x16x8xf32>
    %74 = arith.maximumf %72, %73 : vector<2x16x8xf32>
    %75 = arith.addf %3, %74 : vector<2x16x8xf32>
    %c0_59 = arith.constant 0 : index
    %c0_60 = arith.constant 0 : index
    %c0_61 = arith.constant 0 : index
    %76 = vector.load %arg10[%c0_59, %c0_60, %c0_61] : memref<2x16x8xf32, #tpu.memory_space<vmem>>, vector<2x16x8xf32>
    tpu.vector_store %arg10[%c0_59, %c0_60, %c0_61], %75 {strides = array<i32>} : memref<2x16x8xf32, #tpu.memory_space<vmem>>, vector<2x16x8xf32>,
    %c0_62 = arith.constant 0 : index
    %c0_63 = arith.constant 0 : index
    %c0_64 = arith.constant 0 : index
    %77 = vector.load %arg10[%c0_62, %c0_63, %c0_64] : memref<2x16x8xf32, #tpu.memory_space<vmem>>, vector<2x1x8xf32>
    %78 = vector.shape_cast %77 : vector<2x1x8xf32> to vector<2x8xf32>
    %c0_65 = arith.constant 0 : index
    %c0_66 = arith.constant 0 : index
    %79 = vector.load %arg7[%c0_65, %c0_66] : memref<2x128xf32, #tpu.memory_space<vmem>>, vector<2x8xf32>
    tpu.vector_store %arg7[%c0_65, %c0_66], %78 {strides = array<i32>} : memref<2x128xf32, #tpu.memory_space<vmem>>, vector<2x8xf32>,
    %c0_67 = arith.constant 0 : index
    %c1_68 = arith.constant 1 : index
    %c0_69 = arith.constant 0 : index
    %80 = vector.load %arg10[%c0_67, %c1_68, %c0_69] : memref<2x16x8xf32, #tpu.memory_space<vmem>>, vector<2x1x8xf32>
    %81 = vector.shape_cast %80 : vector<2x1x8xf32> to vector<2x8xf32>
    %c0_70 = arith.constant 0 : index
    %c8_71 = arith.constant 8 : index
    %82 = vector.load %arg7[%c0_70, %c8_71] : memref<2x128xf32, #tpu.memory_space<vmem>>, vector<2x8xf32>
    tpu.vector_store %arg7[%c0_70, %c8_71], %81 {strides = array<i32>} : memref<2x128xf32, #tpu.memory_space<vmem>>, vector<2x8xf32>,
    %c0_72 = arith.constant 0 : index
    %c2_73 = arith.constant 2 : index
    %c0_74 = arith.constant 0 : index
    %83 = vector.load %arg10[%c0_72, %c2_73, %c0_74] : memref<2x16x8xf32, #tpu.memory_space<vmem>>, vector<2x1x8xf32>
    %84 = vector.shape_cast %83 : vector<2x1x8xf32> to vector<2x8xf32>
    %c0_75 = arith.constant 0 : index
    %c16_76 = arith.constant 16 : index
    %85 = vector.load %arg7[%c0_75, %c16_76] : memref<2x128xf32, #tpu.memory_space<vmem>>, vector<2x8xf32>
    tpu.vector_store %arg7[%c0_75, %c16_76], %84 {strides = array<i32>} : memref<2x128xf32, #tpu.memory_space<vmem>>, vector<2x8xf32>,
    %c0_77 = arith.constant 0 : index
    %c3_78 = arith.constant 3 : index
    %c0_79 = arith.constant 0 : index
    %86 = vector.load %arg10[%c0_77, %c3_78, %c0_79] : memref<2x16x8xf32, #tpu.memory_space<vmem>>, vector<2x1x8xf32>
    %87 = vector.shape_cast %86 : vector<2x1x8xf32> to vector<2x8xf32>
    %c0_80 = arith.constant 0 : index
    %c24_81 = arith.constant 24 : index
    %88 = vector.load %arg7[%c0_80, %c24_81] : memref<2x128xf32, #tpu.memory_space<vmem>>, vector<2x8xf32>
    tpu.vector_store %arg7[%c0_80, %c24_81], %87 {strides = array<i32>} : memref<2x128xf32, #tpu.memory_space<vmem>>, vector<2x8xf32>,
    %c0_82 = arith.constant 0 : index
    %c4_83 = arith.constant 4 : index
    %c0_84 = arith.constant 0 : index
    %89 = vector.load %arg10[%c0_82, %c4_83, %c0_84] : memref<2x16x8xf32, #tpu.memory_space<vmem>>, vector<2x1x8xf32>
    %90 = vector.shape_cast %89 : vector<2x1x8xf32> to vector<2x8xf32>
    %c0_85 = arith.constant 0 : index
    %c32_86 = arith.constant 32 : index
    %91 = vector.load %arg7[%c0_85, %c32_86] : memref<2x128xf32, #tpu.memory_space<vmem>>, vector<2x8xf32>
    tpu.vector_store %arg7[%c0_85, %c32_86], %90 {strides = array<i32>} : memref<2x128xf32, #tpu.memory_space<vmem>>, vector<2x8xf32>,
    %c0_87 = arith.constant 0 : index
    %c5_88 = arith.constant 5 : index
    %c0_89 = arith.constant 0 : index
    %92 = vector.load %arg10[%c0_87, %c5_88, %c0_89] : memref<2x16x8xf32, #tpu.memory_space<vmem>>, vector<2x1x8xf32>
    %93 = vector.shape_cast %92 : vector<2x1x8xf32> to vector<2x8xf32>
    %c0_90 = arith.constant 0 : index
    %c40_91 = arith.constant 40 : index
    %94 = vector.load %arg7[%c0_90, %c40_91] : memref<2x128xf32, #tpu.memory_space<vmem>>, vector<2x8xf32>
    tpu.vector_store %arg7[%c0_90, %c40_91], %93 {strides = array<i32>} : memref<2x128xf32, #tpu.memory_space<vmem>>, vector<2x8xf32>,
    %c0_92 = arith.constant 0 : index
    %c6_93 = arith.constant 6 : index
    %c0_94 = arith.constant 0 : index
    %95 = vector.load %arg10[%c0_92, %c6_93, %c0_94] : memref<2x16x8xf32, #tpu.memory_space<vmem>>, vector<2x1x8xf32>
    %96 = vector.shape_cast %95 : vector<2x1x8xf32> to vector<2x8xf32>
    %c0_95 = arith.constant 0 : index
    %c48_96 = arith.constant 48 : index
    %97 = vector.load %arg7[%c0_95, %c48_96] : memref<2x128xf32, #tpu.memory_space<vmem>>, vector<2x8xf32>
    tpu.vector_store %arg7[%c0_95, %c48_96], %96 {strides = array<i32>} : memref<2x128xf32, #tpu.memory_space<vmem>>, vector<2x8xf32>,
    %c0_97 = arith.constant 0 : index
    %c7_98 = arith.constant 7 : index
    %c0_99 = arith.constant 0 : index
    %98 = vector.load %arg10[%c0_97, %c7_98, %c0_99] : memref<2x16x8xf32, #tpu.memory_space<vmem>>, vector<2x1x8xf32>
    %99 = vector.shape_cast %98 : vector<2x1x8xf32> to vector<2x8xf32>
    %c0_100 = arith.constant 0 : index
    %c56_101 = arith.constant 56 : index
    %100 = vector.load %arg7[%c0_100, %c56_101] : memref<2x128xf32, #tpu.memory_space<vmem>>, vector<2x8xf32>
    tpu.vector_store %arg7[%c0_100, %c56_101], %99 {strides = array<i32>} : memref<2x128xf32, #tpu.memory_space<vmem>>, vector<2x8xf32>,
    %c0_102 = arith.constant 0 : index
    %c8_103 = arith.constant 8 : index
    %c0_104 = arith.constant 0 : index
    %101 = vector.load %arg10[%c0_102, %c8_103, %c0_104] : memref<2x16x8xf32, #tpu.memory_space<vmem>>, vector<2x1x8xf32>
    %102 = vector.shape_cast %101 : vector<2x1x8xf32> to vector<2x8xf32>
    %c0_105 = arith.constant 0 : index
    %c64 = arith.constant 64 : index
    %103 = vector.load %arg7[%c0_105, %c64] : memref<2x128xf32, #tpu.memory_space<vmem>>, vector<2x8xf32>
    tpu.vector_store %arg7[%c0_105, %c64], %102 {strides = array<i32>} : memref<2x128xf32, #tpu.memory_space<vmem>>, vector<2x8xf32>,
    %c0_106 = arith.constant 0 : index
    %c9 = arith.constant 9 : index
    %c0_107 = arith.constant 0 : index
    %104 = vector.load %arg10[%c0_106, %c9, %c0_107] : memref<2x16x8xf32, #tpu.memory_space<vmem>>, vector<2x1x8xf32>
    %105 = vector.shape_cast %104 : vector<2x1x8xf32> to vector<2x8xf32>
    %c0_108 = arith.constant 0 : index
    %c72 = arith.constant 72 : index
    %106 = vector.load %arg7[%c0_108, %c72] : memref<2x128xf32, #tpu.memory_space<vmem>>, vector<2x8xf32>
    tpu.vector_store %arg7[%c0_108, %c72], %105 {strides = array<i32>} : memref<2x128xf32, #tpu.memory_space<vmem>>, vector<2x8xf32>,
    %c0_109 = arith.constant 0 : index
    %c10 = arith.constant 10 : index
    %c0_110 = arith.constant 0 : index
    %107 = vector.load %arg10[%c0_109, %c10, %c0_110] : memref<2x16x8xf32, #tpu.memory_space<vmem>>, vector<2x1x8xf32>
    %108 = vector.shape_cast %107 : vector<2x1x8xf32> to vector<2x8xf32>
    %c0_111 = arith.constant 0 : index
    %c80 = arith.constant 80 : index
    %109 = vector.load %arg7[%c0_111, %c80] : memref<2x128xf32, #tpu.memory_space<vmem>>, vector<2x8xf32>
    tpu.vector_store %arg7[%c0_111, %c80], %108 {strides = array<i32>} : memref<2x128xf32, #tpu.memory_space<vmem>>, vector<2x8xf32>,
    %c0_112 = arith.constant 0 : index
    %c11 = arith.constant 11 : index
    %c0_113 = arith.constant 0 : index
    %110 = vector.load %arg10[%c0_112, %c11, %c0_113] : memref<2x16x8xf32, #tpu.memory_space<vmem>>, vector<2x1x8xf32>
    %111 = vector.shape_cast %110 : vector<2x1x8xf32> to vector<2x8xf32>
    %c0_114 = arith.constant 0 : index
    %c88 = arith.constant 88 : index
    %112 = vector.load %arg7[%c0_114, %c88] : memref<2x128xf32, #tpu.memory_space<vmem>>, vector<2x8xf32>
    tpu.vector_store %arg7[%c0_114, %c88], %111 {strides = array<i32>} : memref<2x128xf32, #tpu.memory_space<vmem>>, vector<2x8xf32>,
    %c0_115 = arith.constant 0 : index
    %c12 = arith.constant 12 : index
    %c0_116 = arith.constant 0 : index
    %113 = vector.load %arg10[%c0_115, %c12, %c0_116] : memref<2x16x8xf32, #tpu.memory_space<vmem>>, vector<2x1x8xf32>
    %114 = vector.shape_cast %113 : vector<2x1x8xf32> to vector<2x8xf32>
    %c0_117 = arith.constant 0 : index
    %c96 = arith.constant 96 : index
    %115 = vector.load %arg7[%c0_117, %c96] : memref<2x128xf32, #tpu.memory_space<vmem>>, vector<2x8xf32>
    tpu.vector_store %arg7[%c0_117, %c96], %114 {strides = array<i32>} : memref<2x128xf32, #tpu.memory_space<vmem>>, vector<2x8xf32>,
    %c0_118 = arith.constant 0 : index
    %c13 = arith.constant 13 : index
    %c0_119 = arith.constant 0 : index
    %116 = vector.load %arg10[%c0_118, %c13, %c0_119] : memref<2x16x8xf32, #tpu.memory_space<vmem>>, vector<2x1x8xf32>
    %117 = vector.shape_cast %116 : vector<2x1x8xf32> to vector<2x8xf32>
    %c0_120 = arith.constant 0 : index
    %c104 = arith.constant 104 : index
    %118 = vector.load %arg7[%c0_120, %c104] : memref<2x128xf32, #tpu.memory_space<vmem>>, vector<2x8xf32>
    tpu.vector_store %arg7[%c0_120, %c104], %117 {strides = array<i32>} : memref<2x128xf32, #tpu.memory_space<vmem>>, vector<2x8xf32>,
    %c0_121 = arith.constant 0 : index
    %c14 = arith.constant 14 : index
    %c0_122 = arith.constant 0 : index
    %119 = vector.load %arg10[%c0_121, %c14, %c0_122] : memref<2x16x8xf32, #tpu.memory_space<vmem>>, vector<2x1x8xf32>
    %120 = vector.shape_cast %119 : vector<2x1x8xf32> to vector<2x8xf32>
    %c0_123 = arith.constant 0 : index
    %c112 = arith.constant 112 : index
    %121 = vector.load %arg7[%c0_123, %c112] : memref<2x128xf32, #tpu.memory_space<vmem>>, vector<2x8xf32>
    tpu.vector_store %arg7[%c0_123, %c112], %120 {strides = array<i32>} : memref<2x128xf32, #tpu.memory_space<vmem>>, vector<2x8xf32>,
    %c0_124 = arith.constant 0 : index
    %c15 = arith.constant 15 : index
    %c0_125 = arith.constant 0 : index
    %122 = vector.load %arg10[%c0_124, %c15, %c0_125] : memref<2x16x8xf32, #tpu.memory_space<vmem>>, vector<2x1x8xf32>
    %123 = vector.shape_cast %122 : vector<2x1x8xf32> to vector<2x8xf32>
    %c0_126 = arith.constant 0 : index
    %c120 = arith.constant 120 : index
    %124 = vector.load %arg7[%c0_126, %c120] : memref<2x128xf32, #tpu.memory_space<vmem>>, vector<2x8xf32>
    tpu.vector_store %arg7[%c0_126, %c120], %123 {strides = array<i32>} : memref<2x128xf32, #tpu.memory_space<vmem>>, vector<2x8xf32>,
    return
  }
}

</mosaic_0001>

<llo_original>
// kernel: tpu_custom_call.1
$region0: #{tpu_custom_call.1}
  #allocation0 [shape = 'u32[]', space=smem, size = 0x4, offset = 0x4, fixed_abs, tag = 'smem constant byte address 0x4 - core index']
  #allocation1 [shape = 'u32[144,128]{1,0:T(1,128)}', space=vmem, size = 0x12000, scoped, tag = 'internal scratch']
  #allocation2 [shape = 'f32[2,64]{1,0:T(2,128)}', space=vmem, size = 0x400, scoped, tag = 'scratch operand']
  #allocation3 [shape = 'f32[2,8,8]{2,1,0:T(8,128)}', space=vmem, size = 0x2000, scoped, tag = 'scratch operand']
  #allocation4 [shape = 'f32[2,16,8]{2,1,0:T(8,128)}', space=vmem, size = 0x4000, scoped, tag = 'scratch operand']
  %s0 = inlined_call_operand.vmem [shape: f32[2,8], index: 0, kind: input, shape index: {}]
  %s1 = inlined_call_operand.vmem [shape: f32[2,16,8], index: 1, kind: input, shape index: {}]
  %s2 = inlined_call_operand.vmem [shape: f32[2,8,16], index: 2, kind: input, shape index: {}]
  %s3 = inlined_call_operand.vmem [shape: f32[2,16,8], index: 3, kind: input, shape index: {}]
  %s4 = inlined_call_operand.vmem [shape: f32[8,64], index: 4, kind: input, shape index: {}]
  %s5 = inlined_call_operand.vmem [shape: f32[1,64,64], index: 5, kind: input, shape index: {}]
  %s6 = inlined_call_operand.vmem [shape: f32[2,64], index: 6, kind: input, shape index: {}]
  %s7 = inlined_call_operand.hbm [shape: f32[2,128], index: 7, kind: output, shape index: {}]
  %s8 = sld [smem:[#allocation0]]
  $region38: #{tpu_custom_call.1} parent=0
    _
  %s10 = ssub.s32 1, %s8
  %s11 = scalar_select 0, %s10, %s8
  $region1: #{tpu_custom_call.1} parent=0
    #allocation5 [shape = 'u8[1024]{0}', space=vmem, size = 0x400, scoped, tag = 'output window, operand 0, single buffered']
    #allocation6 [shape = 's32[1]{0}', space=sflag, size = 0x4, scoped, tag = 'scoped memory for tpu_custom_call.1']
    %12 = vsyncpa [#allocation6], 0
    // Predicated region
    $region2: #{tpu_custom_call.1} parent=1 // pred_check
      _
    $region3: #{tpu_custom_call.1} parent=1 // pred_check_branch
      %14 = sbr.rel (0) target = $region5
    $region4: #{tpu_custom_call.1} parent=1 // pred_region
      _
    $region5: #{tpu_custom_call.1} parent=1 // pred_fallthru
      _
    // Predicated region
    $region6: #{tpu_custom_call.1} parent=1 // pred_check
      _
    $region7: #{tpu_custom_call.1} parent=1 // pred_check_branch
      %16 = sbr.rel (0) target = $region9
    $region8: #{tpu_custom_call.1} parent=1 // pred_region
      _
    $region9: #{tpu_custom_call.1} parent=1 // pred_fallthru
      _
    // Predicated region
    $region10: #{tpu_custom_call.1} parent=1 // pred_check
      _
    $region11: #{tpu_custom_call.1} parent=1 // pred_check_branch
      %18 = sbr.rel (0) target = $region13
    $region12: #{tpu_custom_call.1} parent=1 // pred_region
      _
    $region13: #{tpu_custom_call.1} parent=1 // pred_fallthru
      _
    // Predicated region
    $region14: #{tpu_custom_call.1} parent=1 // pred_check
      _
    $region15: #{tpu_custom_call.1} parent=1 // pred_check_branch
      %20 = sbr.rel (0) target = $region17
    $region16: #{tpu_custom_call.1} parent=1 // pred_region
      _
    $region17: #{tpu_custom_call.1} parent=1 // pred_fallthru
      _
    // Predicated region
    $region18: #{tpu_custom_call.1} parent=1 // pred_check
      _
    $region19: #{tpu_custom_call.1} parent=1 // pred_check_branch
      %22 = sbr.rel (0) target = $region21
    $region20: #{tpu_custom_call.1} parent=1 // pred_region
      _
    $region21: #{tpu_custom_call.1} parent=1 // pred_fallthru
      _
    // Predicated region
    $region22: #{tpu_custom_call.1} parent=1 // pred_check
      _
    $region23: #{tpu_custom_call.1} parent=1 // pred_check_branch
      %24 = sbr.rel (0) target = $region25
    $region24: #{tpu_custom_call.1} parent=1 // pred_region
      _
    $region25: #{tpu_custom_call.1} parent=1 // pred_fallthru
      _
    // Predicated region
    $region26: #{tpu_custom_call.1} parent=1 // pred_check
      _
    $region27: #{tpu_custom_call.1} parent=1 // pred_check_branch
      %26 = sbr.rel (0) target = $region29
    $region28: #{tpu_custom_call.1} parent=1 // pred_region
      _
    $region29: #{tpu_custom_call.1} parent=1 // pred_fallthru
      _
    %v27 = vld [vmem:[%s0] sm:$0x3]
    %v28 = vld [vmem:[%s1] sm:$0xff]
    %v29 = vld [vmem:[%s1 + $0x8] sm:$0xff]
    %v30 = vld [vmem:[%s1 + $0x10] sm:$0xff]
    %v31 = vld [vmem:[%s1 + $0x18] sm:$0xff]
    %v32 = vld [vmem:[%s2] sm:$0xff]
    %v33 = vld [vmem:[%s2 + $0x8] sm:$0xff]
    %v34 = vld [vmem:[%s3] sm:$0xff]
    %v35 = vld [vmem:[%s3 + $0x8] sm:$0xff]
    %v36 = vld [vmem:[%s3 + $0x10] sm:$0xff]
    %v37 = vld [vmem:[%s3 + $0x18] sm:$0xff]
    %v38 = vld [vmem:[%s6] sm:$0x3]
    %v39 = vld [vmem:[%s4] sm:$0xff]
    %v40 = vlaneseq
    %v41 = vshrl.u32 %v40, 7
    %v42 = vsub.s32 0, %v41
    %v43 = vrot.slane %v38, %v42
    %vm44 = vcmask 64512
    %v46 = vsel %vm44, %v27, 0
    %48 = vmatprep.subr.mxu0 0.0
    %49 = vmatpush1.msra.mxu0 0.0
    %50 = vmatprep.subr.mxu0 0.0
    %51 = vmatpush1.msra.mxu0 0.0
    %52 = vmatprep.subr.mxu0 0.0
    %53 = vmatpush1.msra.mxu0 0.0
    %54 = vmatprep.subr.mxu0 0.0
    %55 = vmatpush1.msra.mxu0 0.0
    %56 = vmatprep.subr.mxu0 0.0
    %57 = vmatpush1.msra.mxu0 0.0
    %58 = vmatprep.subr.mxu0 0.0
    %59 = vmatpush1.msra.mxu0 0.0
    %60 = vmatprep.subr.mxu0 0.0
    %61 = vmatpush1.msra.mxu0 0.0
    %62 = vmatprep.subr.mxu0 0.0
    %63 = vmatpush1.msra.mxu0 0.0
    %64 = vmatprep.subr.mxu0 0.0
    %65 = vmatpush1.msra.mxu0 0.0
    %66 = vmatprep.subr.mxu0 0.0
    %67 = vmatpush1.msra.mxu0 0.0
    %68 = vmatprep.subr.mxu0 0.0
    %69 = vmatpush1.msra.mxu0 0.0
    %70 = vmatprep.subr.mxu0 0.0
    %71 = vmatpush1.msra.mxu0 0.0
    %72 = vmatprep.subr.mxu0 0.0
    %73 = vmatpush1.msra.mxu0 0.0
    %74 = vmatprep.subr.mxu0 0.0
    %75 = vmatpush1.msra.mxu0 0.0
    %76 = vmatprep.subr.mxu0 0.0
    %77 = vmatpush1.msra.mxu0 0.0
    %78 = vmatprep.subr.mxu0 0.0
    %79 = vmatpush1.msra.mxu0 %v39
    %80 = vmatprep.subr.mxu0 0.0
    %81 = vmatpush2.msra.mxu0 0.0
    %82 = vmatprep.subr.mxu0 0.0
    %83 = vmatpush2.msra.mxu0 0.0
    %84 = vmatprep.subr.mxu0 0.0
    %85 = vmatpush2.msra.mxu0 0.0
    %86 = vmatprep.subr.mxu0 0.0
    %87 = vmatpush2.msra.mxu0 0.0
    %88 = vmatprep.subr.mxu0 0.0
    %89 = vmatpush2.msra.mxu0 0.0
    %90 = vmatprep.subr.mxu0 0.0
    %91 = vmatpush2.msra.mxu0 0.0
    %92 = vmatprep.subr.mxu0 0.0
    %93 = vmatpush2.msra.mxu0 0.0
    %94 = vmatprep.subr.mxu0 0.0
    %95 = vmatpush2.msra.mxu0 0.0
    %96 = vmatprep.subr.mxu0 0.0
    %97 = vmatpush2.msra.mxu0 0.0
    %98 = vmatprep.subr.mxu0 0.0
    %99 = vmatpush2.msra.mxu0 0.0
    %100 = vmatprep.subr.mxu0 0.0
    %101 = vmatpush2.msra.mxu0 0.0
    %102 = vmatprep.subr.mxu0 0.0
    %103 = vmatpush2.msra.mxu0 0.0
    %104 = vmatprep.subr.mxu0 0.0
    %105 = vmatpush2.msra.mxu0 0.0
    %106 = vmatprep.subr.mxu0 0.0
    %107 = vmatpush2.msra.mxu0 0.0
    %108 = vmatprep.subr.mxu0 0.0
    %109 = vmatpush2.msra.mxu0 0.0
    %110 = vmatprep.subr.mxu0 0.0
    %111 = vmatpush2.msra.mxu0 0.0
    %112 = vmatprep.mubr.f32.mxu0 0.0
    %113 = vmatmul.mubr.f32.gmra.mxu0 %v46
    %v114 = vpop.f32.mrf.mxu0
    %v115 = vadd.f32 %v43, %v114
    %v116 = vpop.f32.mrf.mxu0
    %117 = vdwg.mxu0
    %v118 = vmax.f32 %v115, 0.0
    %v119 = vld [vmem:[%s5] sm:$0xff]
    %v120 = vld [vmem:[%s5 + $0x8] sm:$0xff]
    %v121 = vld [vmem:[%s5 + $0x10] sm:$0xff]
    %v122 = vld [vmem:[%s5 + $0x18] sm:$0xff]
    %v123 = vld [vmem:[%s5 + $0x20] sm:$0xff]
    %v124 = vld [vmem:[%s5 + $0x28] sm:$0xff]
    %v125 = vld [vmem:[%s5 + $0x30] sm:$0xff]
    %v126 = vld [vmem:[%s5 + $0x38] sm:$0xff]
    %v127 = vlaneseq
    %v128 = vshrl.u32 %v127, 7
    %v129 = vsub.s32 1, %v128
    %v130 = vrot.slane %v38, %v129
    %vm131 = vcmask 523264
    %v133 = vsel %vm131, %v118, 0
    %135 = vmatprep.subr.mxu0 0.0
    %136 = vmatpush1.msra.mxu0 0.0
    %137 = vmatprep.subr.mxu0 0.0
    %138 = vmatpush1.msra.mxu0 0.0
    %139 = vmatprep.subr.mxu0 0.0
    %140 = vmatpush1.msra.mxu0 0.0
    %141 = vmatprep.subr.mxu0 0.0
    %142 = vmatpush1.msra.mxu0 0.0
    %143 = vmatprep.subr.mxu0 0.0
    %144 = vmatpush1.msra.mxu0 0.0
    %145 = vmatprep.subr.mxu0 0.0
    %146 = vmatpush1.msra.mxu0 0.0
    %147 = vmatprep.subr.mxu0 0.0
    %148 = vmatpush1.msra.mxu0 0.0
    %149 = vmatprep.subr.mxu0 0.0
    %150 = vmatpush1.msra.mxu0 0.0
    %151 = vmatprep.subr.mxu0 0.0
    %152 = vmatpush1.msra.mxu0 %v126
    %153 = vmatprep.subr.mxu0 0.0
    %154 = vmatpush1.msra.mxu0 %v125
    %155 = vmatprep.subr.mxu0 0.0
    %156 = vmatpush1.msra.mxu0 %v124
    %157 = vmatprep.subr.mxu0 0.0
    %158 = vmatpush1.msra.mxu0 %v123
    %159 = vmatprep.subr.mxu0 0.0
    %160 = vmatpush1.msra.mxu0 %v122
    %161 = vmatprep.subr.mxu0 0.0
    %162 = vmatpush1.msra.mxu0 %v121
    %163 = vmatprep.subr.mxu0 0.0
    %164 = vmatpush1.msra.mxu0 %v120
    %165 = vmatprep.subr.mxu0 0.0
    %166 = vmatpush1.msra.mxu0 %v119
    %167 = vmatprep.subr.mxu0 0.0
    %168 = vmatpush2.msra.mxu0 0.0
    %169 = vmatprep.subr.mxu0 0.0
    %170 = vmatpush2.msra.mxu0 0.0
    %171 = vmatprep.subr.mxu0 0.0
    %172 = vmatpush2.msra.mxu0 0.0
    %173 = vmatprep.subr.mxu0 0.0
    %174 = vmatpush2.msra.mxu0 0.0
    %175 = vmatprep.subr.mxu0 0.0
    %176 = vmatpush2.msra.mxu0 0.0
    %177 = vmatprep.subr.mxu0 0.0
    %178 = vmatpush2.msra.mxu0 0.0
    %179 = vmatprep.subr.mxu0 0.0
    %180 = vmatpush2.msra.mxu0 0.0
    %181 = vmatprep.subr.mxu0 0.0
    %182 = vmatpush2.msra.mxu0 0.0
    %183 = vmatprep.subr.mxu0 0.0
    %184 = vmatpush2.msra.mxu0 0.0
    %185 = vmatprep.subr.mxu0 0.0
    %186 = vmatpush2.msra.mxu0 0.0
    %187 = vmatprep.subr.mxu0 0.0
    %188 = vmatpush2.msra.mxu0 0.0
    %189 = vmatprep.subr.mxu0 0.0
    %190 = vmatpush2.msra.mxu0 0.0
    %191 = vmatprep.subr.mxu0 0.0
    %192 = vmatpush2.msra.mxu0 0.0
    %193 = vmatprep.subr.mxu0 0.0
    %194 = vmatpush2.msra.mxu0 0.0
    %195 = vmatprep.subr.mxu0 0.0
    %196 = vmatpush2.msra.mxu0 0.0
    %197 = vmatprep.subr.mxu0 0.0
    %198 = vmatpush2.msra.mxu0 0.0
    %199 = vmatprep.mubr.f32.mxu0 0.0
    %200 = vmatmul.mubr.f32.gmra.mxu0 %v133
    %v201 = vpop.f32.mrf.mxu0
    %v202 = vadd.f32 %v130, %v201
    %v203 = vpop.f32.mrf.mxu0
    %204 = vdwg.mxu0
    %vm205 = vcmask 517120
    %206 = vst.msk [vmem:[#allocation2] sm:$0x3] %vm205, %v202
    %v207 = vld [vmem:[#allocation2] sm:$0x3]
    %v210 = vunpack.c.l.s4 1966171168
    %v211 = vunpack.c.0.s8 %v210
    %v212 = vlaneseq
    %v213 = vshrl.u32 %v212, 7
    %v214 = vsub.s32 %v211, %v213
    %v215 = vrot.slane %v207, %v214
    %v216 = vcombine.high %v215, %v215
    %v218 = vunpack.c.l.s4 1966171168
    %v219 = vunpack.c.0.s8 %v218
    %v220 = vlaneseq
    %v221 = vshrl.u32 %v220, 7
    %v222 = vsub.s32 %v219, %v221
    %v223 = vrot.slane %v215, %v222
    %v225 = vunpack.c.l.s4 1966171168
    %v226 = vunpack.c.0.s8 %v225
    %v227 = vlaneseq
    %v228 = vshrl.u32 %v227, 7
    %v229 = vsub.s32 %v226, %v228
    %v230 = vrot.slane %v216, %v229
    %vm233 = vcmask 57344
    %234 = vst.msk [vmem:[#allocation3] sm:$0x1] %vm233, %v223
    %235 = vst.msk [vmem:[#allocation3 + $0x8] sm:$0x1] %vm233, %v230
    %v236 = vld [vmem:[#allocation2] sm:$0x3]
    %v239 = vunpack.c.l.s4 1966171168
    %v240 = vunpack.c.0.s8 %v239
    %v241 = vlaneseq
    %v242 = vshrl.u32 %v241, 7
    %v243 = vsub.s32 %v240, %v242
    %v244 = vrot.slane %v236, %v243
    %v245 = vcombine.high %v244, %v244
    %v247 = vunpack.c.l.s4 1966171168
    %v248 = vunpack.c.0.s8 %v247
    %v249 = vlaneseq
    %v250 = vshrl.u32 %v249, 7
    %v251 = vsub.s32 %v248, %v250
    %v252 = vrot.slane %v244, %v251
    %v254 = vunpack.c.l.s4 1966171168
    %v255 = vunpack.c.0.s8 %v254
    %v256 = vlaneseq
    %v257 = vshrl.u32 %v256, 7
    %v258 = vsub.s32 %v255, %v257
    %v259 = vrot.slane %v245, %v258
    %v260 = vlaneseq
    %v261 = vshrl.u32 %v260, 7
    %v262 = vsub.s32 0, %v261
    %v263 = vrot.slane %v252, %v262
    %v264 = vlaneseq
    %v265 = vshrl.u32 %v264, 7
    %v266 = vsub.s32 0, %v265
    %v267 = vrot.slane %v259, %v266
    %268 = vrot.lane.b32.xlu0 %v263, 120
    %v269 = vpop.permute.xlu0 %268
    %270 = vrot.lane.b32.xlu0 %v267, 120
    %v271 = vpop.permute.xlu0 %270
    %274 = vst.msk [vmem:[#allocation3 + $0x1] sm:$0x1] %vm233, %v269
    %275 = vst.msk [vmem:[#allocation3 + $0x9] sm:$0x1] %vm233, %v271
    %v276 = vld [vmem:[#allocation2] sm:$0x3]
    %v279 = vunpack.c.l.s4 1966171168
    %v280 = vunpack.c.0.s8 %v279
    %v281 = vlaneseq
    %v282 = vshrl.u32 %v281, 7
    %v283 = vsub.s32 %v280, %v282
    %v284 = vrot.slane %v276, %v283
    %v285 = vcombine.high %v284, %v284
    %v287 = vunpack.c.l.s4 1966171168
    %v288 = vunpack.c.0.s8 %v287
    %v289 = vlaneseq
    %v290 = vshrl.u32 %v289, 7
    %v291 = vsub.s32 %v288, %v290
    %v292 = vrot.slane %v284, %v291
    %v294 = vunpack.c.l.s4 1966171168
    %v295 = vunpack.c.0.s8 %v294
    %v296 = vlaneseq
    %v297 = vshrl.u32 %v296, 7
    %v298 = vsub.s32 %v295, %v297
    %v299 = vrot.slane %v285, %v298
    %v300 = vlaneseq
    %v301 = vshrl.u32 %v300, 7
    %v302 = vsub.s32 0, %v301
    %v303 = vrot.slane %v292, %v302
    %v304 = vlaneseq
    %v305 = vshrl.u32 %v304, 7
    %v306 = vsub.s32 0, %v305
    %v307 = vrot.slane %v299, %v306
    %308 = vrot.lane.b32.xlu0 %v303, 112
    %v309 = vpop.permute.xlu0 %308
    %310 = vrot.lane.b32.xlu0 %v307, 112
    %v311 = vpop.permute.xlu0 %310
    %314 = vst.msk [vmem:[#allocation3 + $0x2] sm:$0x1] %vm233, %v309
    %315 = vst.msk [vmem:[#allocation3 + $0xa] sm:$0x1] %vm233, %v311
    %v316 = vld [vmem:[#allocation2] sm:$0x3]
    %v319 = vunpack.c.l.s4 1966171168
    %v320 = vunpack.c.0.s8 %v319
    %v321 = vlaneseq
    %v322 = vshrl.u32 %v321, 7
    %v323 = vsub.s32 %v320, %v322
    %v324 = vrot.slane %v316, %v323
    %v325 = vcombine.high %v324, %v324
    %v327 = vunpack.c.l.s4 1966171168
    %v328 = vunpack.c.0.s8 %v327
    %v329 = vlaneseq
    %v330 = vshrl.u32 %v329, 7
    %v331 = vsub.s32 %v328, %v330
    %v332 = vrot.slane %v324, %v331
    %v334 = vunpack.c.l.s4 1966171168
    %v335 = vunpack.c.0.s8 %v334
    %v336 = vlaneseq
    %v337 = vshrl.u32 %v336, 7
    %v338 = vsub.s32 %v335, %v337
    %v339 = vrot.slane %v325, %v338
    %v340 = vlaneseq
    %v341 = vshrl.u32 %v340, 7
    %v342 = vsub.s32 0, %v341
    %v343 = vrot.slane %v332, %v342
    %v344 = vlaneseq
    %v345 = vshrl.u32 %v344, 7
    %v346 = vsub.s32 0, %v345
    %v347 = vrot.slane %v339, %v346
    %348 = vrot.lane.b32.xlu0 %v343, 104
    %v349 = vpop.permute.xlu0 %348
    %350 = vrot.lane.b32.xlu0 %v347, 104
    %v351 = vpop.permute.xlu0 %350
    %354 = vst.msk [vmem:[#allocation3 + $0x3] sm:$0x1] %vm233, %v349
    %355 = vst.msk [vmem:[#allocation3 + $0xb] sm:$0x1] %vm233, %v351
    %v356 = vld [vmem:[#allocation2] sm:$0x3]
    %v359 = vunpack.c.l.s4 1966171168
    %v360 = vunpack.c.0.s8 %v359
    %v361 = vlaneseq
    %v362 = vshrl.u32 %v361, 7
    %v363 = vsub.s32 %v360, %v362
    %v364 = vrot.slane %v356, %v363
    %v365 = vcombine.high %v364, %v364
    %v367 = vunpack.c.l.s4 1966171168
    %v368 = vunpack.c.0.s8 %v367
    %v369 = vlaneseq
    %v370 = vshrl.u32 %v369, 7
    %v371 = vsub.s32 %v368, %v370
    %v372 = vrot.slane %v364, %v371
    %v374 = vunpack.c.l.s4 1966171168
    %v375 = vunpack.c.0.s8 %v374
    %v376 = vlaneseq
    %v377 = vshrl.u32 %v376, 7
    %v378 = vsub.s32 %v375, %v377
    %v379 = vrot.slane %v365, %v378
    %v380 = vlaneseq
    %v381 = vshrl.u32 %v380, 7
    %v382 = vsub.s32 0, %v381
    %v383 = vrot.slane %v372, %v382
    %v384 = vlaneseq
    %v385 = vshrl.u32 %v384, 7
    %v386 = vsub.s32 0, %v385
    %v387 = vrot.slane %v379, %v386
    %388 = vrot.lane.b32.xlu0 %v383, 96
    %v389 = vpop.permute.xlu0 %388
    %390 = vrot.lane.b32.xlu0 %v387, 96
    %v391 = vpop.permute.xlu0 %390
    %394 = vst.msk [vmem:[#allocation3 + $0x4] sm:$0x1] %vm233, %v389
    %395 = vst.msk [vmem:[#allocation3 + $0xc] sm:$0x1] %vm233, %v391
    %v396 = vld [vmem:[#allocation2] sm:$0x3]
    %v399 = vunpack.c.l.s4 1966171168
    %v400 = vunpack.c.0.s8 %v399
    %v401 = vlaneseq
    %v402 = vshrl.u32 %v401, 7
    %v403 = vsub.s32 %v400, %v402
    %v404 = vrot.slane %v396, %v403
    %v405 = vcombine.high %v404, %v404
    %v407 = vunpack.c.l.s4 1966171168
    %v408 = vunpack.c.0.s8 %v407
    %v409 = vlaneseq
    %v410 = vshrl.u32 %v409, 7
    %v411 = vsub.s32 %v408, %v410
    %v412 = vrot.slane %v404, %v411
    %v414 = vunpack.c.l.s4 1966171168
    %v415 = vunpack.c.0.s8 %v414
    %v416 = vlaneseq
    %v417 = vshrl.u32 %v416, 7
    %v418 = vsub.s32 %v415, %v417
    %v419 = vrot.slane %v405, %v418
    %v420 = vlaneseq
    %v421 = vshrl.u32 %v420, 7
    %v422 = vsub.s32 0, %v421
    %v423 = vrot.slane %v412, %v422
    %v424 = vlaneseq
    %v425 = vshrl.u32 %v424, 7
    %v426 = vsub.s32 0, %v425
    %v427 = vrot.slane %v419, %v426
    %428 = vrot.lane.b32.xlu0 %v423, 88
    %v429 = vpop.permute.xlu0 %428
    %430 = vrot.lane.b32.xlu0 %v427, 88
    %v431 = vpop.permute.xlu0 %430
    %434 = vst.msk [vmem:[#allocation3 + $0x5] sm:$0x1] %vm233, %v429
    %435 = vst.msk [vmem:[#allocation3 + $0xd] sm:$0x1] %vm233, %v431
    %v436 = vld [vmem:[#allocation2] sm:$0x3]
    %v439 = vunpack.c.l.s4 1966171168
    %v440 = vunpack.c.0.s8 %v439
    %v441 = vlaneseq
    %v442 = vshrl.u32 %v441, 7
    %v443 = vsub.s32 %v440, %v442
    %v444 = vrot.slane %v436, %v443
    %v445 = vcombine.high %v444, %v444
    %v447 = vunpack.c.l.s4 1966171168
    %v448 = vunpack.c.0.s8 %v447
    %v449 = vlaneseq
    %v450 = vshrl.u32 %v449, 7
    %v451 = vsub.s32 %v448, %v450
    %v452 = vrot.slane %v444, %v451
    %v454 = vunpack.c.l.s4 1966171168
    %v455 = vunpack.c.0.s8 %v454
    %v456 = vlaneseq
    %v457 = vshrl.u32 %v456, 7
    %v458 = vsub.s32 %v455, %v457
    %v459 = vrot.slane %v445, %v458
    %v460 = vlaneseq
    %v461 = vshrl.u32 %v460, 7
    %v462 = vsub.s32 0, %v461
    %v463 = vrot.slane %v452, %v462
    %v464 = vlaneseq
    %v465 = vshrl.u32 %v464, 7
    %v466 = vsub.s32 0, %v465
    %v467 = vrot.slane %v459, %v466
    %468 = vrot.lane.b32.xlu0 %v463, 80
    %v469 = vpop.permute.xlu0 %468
    %470 = vrot.lane.b32.xlu0 %v467, 80
    %v471 = vpop.permute.xlu0 %470
    %474 = vst.msk [vmem:[#allocation3 + $0x6] sm:$0x1] %vm233, %v469
    %475 = vst.msk [vmem:[#allocation3 + $0xe] sm:$0x1] %vm233, %v471
    %v476 = vld [vmem:[#allocation2] sm:$0x3]
    %v479 = vunpack.c.l.s4 1966171168
    %v480 = vunpack.c.0.s8 %v479
    %v481 = vlaneseq
    %v482 = vshrl.u32 %v481, 7
    %v483 = vsub.s32 %v480, %v482
    %v484 = vrot.slane %v476, %v483
    %v485 = vcombine.high %v484, %v484
    %v487 = vunpack.c.l.s4 1966171168
    %v488 = vunpack.c.0.s8 %v487
    %v489 = vlaneseq
    %v490 = vshrl.u32 %v489, 7
    %v491 = vsub.s32 %v488, %v490
    %v492 = vrot.slane %v484, %v491
    %v494 = vunpack.c.l.s4 1966171168
    %v495 = vunpack.c.0.s8 %v494
    %v496 = vlaneseq
    %v497 = vshrl.u32 %v496, 7
    %v498 = vsub.s32 %v495, %v497
    %v499 = vrot.slane %v485, %v498
    %v500 = vlaneseq
    %v501 = vshrl.u32 %v500, 7
    %v502 = vsub.s32 0, %v501
    %v503 = vrot.slane %v492, %v502
    %v504 = vlaneseq
    %v505 = vshrl.u32 %v504, 7
    %v506 = vsub.s32 0, %v505
    %v507 = vrot.slane %v499, %v506
    %508 = vrot.lane.b32.xlu0 %v503, 72
    %v509 = vpop.permute.xlu0 %508
    %510 = vrot.lane.b32.xlu0 %v507, 72
    %v511 = vpop.permute.xlu0 %510
    %514 = vst.msk [vmem:[#allocation3 + $0x7] sm:$0x1] %vm233, %v509
    %515 = vst.msk [vmem:[#allocation3 + $0xf] sm:$0x1] %vm233, %v511
    %v516 = vld [vmem:[#allocation3] sm:$0xff]
    %v517 = vld [vmem:[#allocation3 + $0x8] sm:$0xff]
    %vm518 = vcmask 130048
    %v520 = vsel %vm518, %v32, 0
    %522 = vmatprep.subr.mxu0 0.0
    %523 = vmatpush1.msra.mxu0 0.0
    %524 = vmatprep.subr.mxu0 0.0
    %525 = vmatpush1.msra.mxu0 0.0
    %526 = vmatprep.subr.mxu0 0.0
    %527 = vmatpush1.msra.mxu0 0.0
    %528 = vmatprep.subr.mxu0 0.0
    %529 = vmatpush1.msra.mxu0 0.0
    %530 = vmatprep.subr.mxu0 0.0
    %531 = vmatpush1.msra.mxu0 0.0
    %532 = vmatprep.subr.mxu0 0.0
    %533 = vmatpush1.msra.mxu0 0.0
    %534 = vmatprep.subr.mxu0 0.0
    %535 = vmatpush1.msra.mxu0 0.0
    %536 = vmatprep.subr.mxu0 0.0
    %537 = vmatpush1.msra.mxu0 0.0
    %538 = vmatprep.subr.mxu0 0.0
    %539 = vmatpush1.msra.mxu0 0.0
    %540 = vmatprep.subr.mxu0 0.0
    %541 = vmatpush1.msra.mxu0 0.0
    %542 = vmatprep.subr.mxu0 0.0
    %543 = vmatpush1.msra.mxu0 0.0
    %544 = vmatprep.subr.mxu0 0.0
    %545 = vmatpush1.msra.mxu0 0.0
    %546 = vmatprep.subr.mxu0 0.0
    %547 = vmatpush1.msra.mxu0 0.0
    %548 = vmatprep.subr.mxu0 0.0
    %549 = vmatpush1.msra.mxu0 0.0
    %550 = vmatprep.subr.mxu0 0.0
    %551 = vmatpush1.msra.mxu0 %v35
    %552 = vmatprep.subr.mxu0 0.0
    %553 = vmatpush1.msra.mxu0 %v34
    %554 = vmatprep.subr.mxu0 0.0
    %555 = vmatpush2.msra.mxu0 0.0
    %556 = vmatprep.subr.mxu0 0.0
    %557 = vmatpush2.msra.mxu0 0.0
    %558 = vmatprep.subr.mxu0 0.0
    %559 = vmatpush2.msra.mxu0 0.0
    %560 = vmatprep.subr.mxu0 0.0
    %561 = vmatpush2.msra.mxu0 0.0
    %562 = vmatprep.subr.mxu0 0.0
    %563 = vmatpush2.msra.mxu0 0.0
    %564 = vmatprep.subr.mxu0 0.0
    %565 = vmatpush2.msra.mxu0 0.0
    %566 = vmatprep.subr.mxu0 0.0
    %567 = vmatpush2.msra.mxu0 0.0
    %568 = vmatprep.subr.mxu0 0.0
    %569 = vmatpush2.msra.mxu0 0.0
    %570 = vmatprep.subr.mxu0 0.0
    %571 = vmatpush2.msra.mxu0 0.0
    %572 = vmatprep.subr.mxu0 0.0
    %573 = vmatpush2.msra.mxu0 0.0
    %574 = vmatprep.subr.mxu0 0.0
    %575 = vmatpush2.msra.mxu0 0.0
    %576 = vmatprep.subr.mxu0 0.0
    %577 = vmatpush2.msra.mxu0 0.0
    %578 = vmatprep.subr.mxu0 0.0
    %579 = vmatpush2.msra.mxu0 0.0
    %580 = vmatprep.subr.mxu0 0.0
    %581 = vmatpush2.msra.mxu0 0.0
    %582 = vmatprep.subr.mxu0 0.0
    %583 = vmatpush2.msra.mxu0 0.0
    %584 = vmatprep.subr.mxu0 0.0
    %585 = vmatpush2.msra.mxu0 0.0
    %586 = vmatprep.mubr.f32.mxu0 0.0
    %587 = vmatmul.mubr.f32.gmra.mxu0 %v520
    %v588 = vpop.f32.mrf.mxu0
    %v589 = vadd.f32 0.0, %v588
    %v590 = vpop.f32.mrf.mxu0
    %591 = vdwg.mxu0
    %v593 = vsel %vm518, %v33, 0
    %595 = vmatprep.subr.mxu0 0.0
    %596 = vmatpush1.msra.mxu0 0.0
    %597 = vmatprep.subr.mxu0 0.0
    %598 = vmatpush1.msra.mxu0 0.0
    %599 = vmatprep.subr.mxu0 0.0
    %600 = vmatpush1.msra.mxu0 0.0
    %601 = vmatprep.subr.mxu0 0.0
    %602 = vmatpush1.msra.mxu0 0.0
    %603 = vmatprep.subr.mxu0 0.0
    %604 = vmatpush1.msra.mxu0 0.0
    %605 = vmatprep.subr.mxu0 0.0
    %606 = vmatpush1.msra.mxu0 0.0
    %607 = vmatprep.subr.mxu0 0.0
    %608 = vmatpush1.msra.mxu0 0.0
    %609 = vmatprep.subr.mxu0 0.0
    %610 = vmatpush1.msra.mxu0 0.0
    %611 = vmatprep.subr.mxu0 0.0
    %612 = vmatpush1.msra.mxu0 0.0
    %613 = vmatprep.subr.mxu0 0.0
    %614 = vmatpush1.msra.mxu0 0.0
    %615 = vmatprep.subr.mxu0 0.0
    %616 = vmatpush1.msra.mxu0 0.0
    %617 = vmatprep.subr.mxu0 0.0
    %618 = vmatpush1.msra.mxu0 0.0
    %619 = vmatprep.subr.mxu0 0.0
    %620 = vmatpush1.msra.mxu0 0.0
    %621 = vmatprep.subr.mxu0 0.0
    %622 = vmatpush1.msra.mxu0 0.0
    %623 = vmatprep.subr.mxu0 0.0
    %624 = vmatpush1.msra.mxu0 %v37
    %625 = vmatprep.subr.mxu0 0.0
    %626 = vmatpush1.msra.mxu0 %v36
    %627 = vmatprep.subr.mxu0 0.0
    %628 = vmatpush2.msra.mxu0 0.0
    %629 = vmatprep.subr.mxu0 0.0
    %630 = vmatpush2.msra.mxu0 0.0
    %631 = vmatprep.subr.mxu0 0.0
    %632 = vmatpush2.msra.mxu0 0.0
    %633 = vmatprep.subr.mxu0 0.0
    %634 = vmatpush2.msra.mxu0 0.0
    %635 = vmatprep.subr.mxu0 0.0
    %636 = vmatpush2.msra.mxu0 0.0
    %637 = vmatprep.subr.mxu0 0.0
    %638 = vmatpush2.msra.mxu0 0.0
    %639 = vmatprep.subr.mxu0 0.0
    %640 = vmatpush2.msra.mxu0 0.0
    %641 = vmatprep.subr.mxu0 0.0
    %642 = vmatpush2.msra.mxu0 0.0
    %643 = vmatprep.subr.mxu0 0.0
    %644 = vmatpush2.msra.mxu0 0.0
    %645 = vmatprep.subr.mxu0 0.0
    %646 = vmatpush2.msra.mxu0 0.0
    %647 = vmatprep.subr.mxu0 0.0
    %648 = vmatpush2.msra.mxu0 0.0
    %649 = vmatprep.subr.mxu0 0.0
    %650 = vmatpush2.msra.mxu0 0.0
    %651 = vmatprep.subr.mxu0 0.0
    %652 = vmatpush2.msra.mxu0 0.0
    %653 = vmatprep.subr.mxu0 0.0
    %654 = vmatpush2.msra.mxu0 0.0
    %655 = vmatprep.subr.mxu0 0.0
    %656 = vmatpush2.msra.mxu0 0.0
    %657 = vmatprep.subr.mxu0 0.0
    %658 = vmatpush2.msra.mxu0 0.0
    %659 = vmatprep.mubr.f32.mxu0 0.0
    %660 = vmatmul.mubr.f32.gmra.mxu0 %v593
    %v661 = vpop.f32.mrf.mxu0
    %v662 = vadd.f32 0.0, %v661
    %v663 = vpop.f32.mrf.mxu0
    %664 = vdwg.mxu0
    %v666 = vsel %vm44, %v516, 0
    %668 = vmatprep.subr.mxu0 0.0
    %669 = vmatpush1.msra.mxu0 0.0
    %670 = vmatprep.subr.mxu0 0.0
    %671 = vmatpush1.msra.mxu0 0.0
    %672 = vmatprep.subr.mxu0 0.0
    %673 = vmatpush1.msra.mxu0 0.0
    %674 = vmatprep.subr.mxu0 0.0
    %675 = vmatpush1.msra.mxu0 0.0
    %676 = vmatprep.subr.mxu0 0.0
    %677 = vmatpush1.msra.mxu0 0.0
    %678 = vmatprep.subr.mxu0 0.0
    %679 = vmatpush1.msra.mxu0 0.0
    %680 = vmatprep.subr.mxu0 0.0
    %681 = vmatpush1.msra.mxu0 0.0
    %682 = vmatprep.subr.mxu0 0.0
    %683 = vmatpush1.msra.mxu0 0.0
    %684 = vmatprep.subr.mxu0 0.0
    %685 = vmatpush1.msra.mxu0 0.0
    %686 = vmatprep.subr.mxu0 0.0
    %687 = vmatpush1.msra.mxu0 0.0
    %688 = vmatprep.subr.mxu0 0.0
    %689 = vmatpush1.msra.mxu0 0.0
    %690 = vmatprep.subr.mxu0 0.0
    %691 = vmatpush1.msra.mxu0 0.0
    %692 = vmatprep.subr.mxu0 0.0
    %693 = vmatpush1.msra.mxu0 0.0
    %694 = vmatprep.subr.mxu0 0.0
    %695 = vmatpush1.msra.mxu0 0.0
    %696 = vmatprep.subr.mxu0 0.0
    %697 = vmatpush1.msra.mxu0 0.0
    %698 = vmatprep.subr.mxu0 0.0
    %699 = vmatpush1.msra.mxu0 %v589
    %700 = vmatprep.subr.mxu0 0.0
    %701 = vmatpush2.msra.mxu0 0.0
    %702 = vmatprep.subr.mxu0 0.0
    %703 = vmatpush2.msra.mxu0 0.0
    %704 = vmatprep.subr.mxu0 0.0
    %705 = vmatpush2.msra.mxu0 0.0
    %706 = vmatprep.subr.mxu0 0.0
    %707 = vmatpush2.msra.mxu0 0.0
    %708 = vmatprep.subr.mxu0 0.0
    %709 = vmatpush2.msra.mxu0 0.0
    %710 = vmatprep.subr.mxu0 0.0
    %711 = vmatpush2.msra.mxu0 0.0
    %712 = vmatprep.subr.mxu0 0.0
    %713 = vmatpush2.msra.mxu0 0.0
    %714 = vmatprep.subr.mxu0 0.0
    %715 = vmatpush2.msra.mxu0 0.0
    %716 = vmatprep.subr.mxu0 0.0
    %717 = vmatpush2.msra.mxu0 0.0
    %718 = vmatprep.subr.mxu0 0.0
    %719 = vmatpush2.msra.mxu0 0.0
    %720 = vmatprep.subr.mxu0 0.0
    %721 = vmatpush2.msra.mxu0 0.0
    %722 = vmatprep.subr.mxu0 0.0
    %723 = vmatpush2.msra.mxu0 0.0
    %724 = vmatprep.subr.mxu0 0.0
    %725 = vmatpush2.msra.mxu0 0.0
    %726 = vmatprep.subr.mxu0 0.0
    %727 = vmatpush2.msra.mxu0 0.0
    %728 = vmatprep.subr.mxu0 0.0
    %729 = vmatpush2.msra.mxu0 0.0
    %730 = vmatprep.subr.mxu0 0.0
    %731 = vmatpush2.msra.mxu0 0.0
    %732 = vmatprep.mubr.f32.mxu0 0.0
    %733 = vmatmul.mubr.f32.gmra.mxu0 %v666
    %v734 = vpop.f32.mrf.mxu0
    %v735 = vadd.f32 0.0, %v734
    %v736 = vpop.f32.mrf.mxu0
    %737 = vdwg.mxu0
    %v739 = vsel %vm44, %v517, 0
    %741 = vmatprep.subr.mxu0 0.0
    %742 = vmatpush1.msra.mxu0 0.0
    %743 = vmatprep.subr.mxu0 0.0
    %744 = vmatpush1.msra.mxu0 0.0
    %745 = vmatprep.subr.mxu0 0.0
    %746 = vmatpush1.msra.mxu0 0.0
    %747 = vmatprep.subr.mxu0 0.0
    %748 = vmatpush1.msra.mxu0 0.0
    %749 = vmatprep.subr.mxu0 0.0
    %750 = vmatpush1.msra.mxu0 0.0
    %751 = vmatprep.subr.mxu0 0.0
    %752 = vmatpush1.msra.mxu0 0.0
    %753 = vmatprep.subr.mxu0 0.0
    %754 = vmatpush1.msra.mxu0 0.0
    %755 = vmatprep.subr.mxu0 0.0
    %756 = vmatpush1.msra.mxu0 0.0
    %757 = vmatprep.subr.mxu0 0.0
    %758 = vmatpush1.msra.mxu0 0.0
    %759 = vmatprep.subr.mxu0 0.0
    %760 = vmatpush1.msra.mxu0 0.0
    %761 = vmatprep.subr.mxu0 0.0
    %762 = vmatpush1.msra.mxu0 0.0
    %763 = vmatprep.subr.mxu0 0.0
    %764 = vmatpush1.msra.mxu0 0.0
    %765 = vmatprep.subr.mxu0 0.0
    %766 = vmatpush1.msra.mxu0 0.0
    %767 = vmatprep.subr.mxu0 0.0
    %768 = vmatpush1.msra.mxu0 0.0
    %769 = vmatprep.subr.mxu0 0.0
    %770 = vmatpush1.msra.mxu0 0.0
    %771 = vmatprep.subr.mxu0 0.0
    %772 = vmatpush1.msra.mxu0 %v662
    %773 = vmatprep.subr.mxu0 0.0
    %774 = vmatpush2.msra.mxu0 0.0
    %775 = vmatprep.subr.mxu0 0.0
    %776 = vmatpush2.msra.mxu0 0.0
    %777 = vmatprep.subr.mxu0 0.0
    %778 = vmatpush2.msra.mxu0 0.0
    %779 = vmatprep.subr.mxu0 0.0
    %780 = vmatpush2.msra.mxu0 0.0
    %781 = vmatprep.subr.mxu0 0.0
    %782 = vmatpush2.msra.mxu0 0.0
    %783 = vmatprep.subr.mxu0 0.0
    %784 = vmatpush2.msra.mxu0 0.0
    %785 = vmatprep.subr.mxu0 0.0
    %786 = vmatpush2.msra.mxu0 0.0
    %787 = vmatprep.subr.mxu0 0.0
    %788 = vmatpush2.msra.mxu0 0.0
    %789 = vmatprep.subr.mxu0 0.0
    %790 = vmatpush2.msra.mxu0 0.0
    %791 = vmatprep.subr.mxu0 0.0
    %792 = vmatpush2.msra.mxu0 0.0
    %793 = vmatprep.subr.mxu0 0.0
    %794 = vmatpush2.msra.mxu0 0.0
    %795 = vmatprep.subr.mxu0 0.0
    %796 = vmatpush2.msra.mxu0 0.0
    %797 = vmatprep.subr.mxu0 0.0
    %798 = vmatpush2.msra.mxu0 0.0
    %799 = vmatprep.subr.mxu0 0.0
    %800 = vmatpush2.msra.mxu0 0.0
    %801 = vmatprep.subr.mxu0 0.0
    %802 = vmatpush2.msra.mxu0 0.0
    %803 = vmatprep.subr.mxu0 0.0
    %804 = vmatpush2.msra.mxu0 0.0
    %805 = vmatprep.mubr.f32.mxu0 0.0
    %806 = vmatmul.mubr.f32.gmra.mxu0 %v739
    %v807 = vpop.f32.mrf.mxu0
    %v808 = vadd.f32 0.0, %v807
    %v809 = vpop.f32.mrf.mxu0
    %810 = vdwg.mxu0
    %v812 = vsel %vm44, %v28, 0
    %v815 = vsel %vm44, %v29, 0
    %817 = vmatprep.subr.mxu0 0.0
    %818 = vmatpush1.msra.mxu0 0.0
    %819 = vmatprep.subr.mxu0 0.0
    %820 = vmatpush1.msra.mxu0 0.0
    %821 = vmatprep.subr.mxu0 0.0
    %822 = vmatpush1.msra.mxu0 0.0
    %823 = vmatprep.subr.mxu0 0.0
    %824 = vmatpush1.msra.mxu0 0.0
    %825 = vmatprep.subr.mxu0 0.0
    %826 = vmatpush1.msra.mxu0 0.0
    %827 = vmatprep.subr.mxu0 0.0
    %828 = vmatpush1.msra.mxu0 0.0
    %829 = vmatprep.subr.mxu0 0.0
    %830 = vmatpush1.msra.mxu0 0.0
    %831 = vmatprep.subr.mxu0 0.0
    %832 = vmatpush1.msra.mxu0 0.0
    %833 = vmatprep.subr.mxu0 0.0
    %834 = vmatpush1.msra.mxu0 0.0
    %835 = vmatprep.subr.mxu0 0.0
    %836 = vmatpush1.msra.mxu0 0.0
    %837 = vmatprep.subr.mxu0 0.0
    %838 = vmatpush1.msra.mxu0 0.0
    %839 = vmatprep.subr.mxu0 0.0
    %840 = vmatpush1.msra.mxu0 0.0
    %841 = vmatprep.subr.mxu0 0.0
    %842 = vmatpush1.msra.mxu0 0.0
    %843 = vmatprep.subr.mxu0 0.0
    %844 = vmatpush1.msra.mxu0 0.0
    %845 = vmatprep.subr.mxu0 0.0
    %846 = vmatpush1.msra.mxu0 0.0
    %847 = vmatprep.subr.mxu0 0.0
    %848 = vmatpush1.msra.mxu0 %v735
    %849 = vmatprep.subr.mxu0 0.0
    %850 = vmatpush2.msra.mxu0 0.0
    %851 = vmatprep.subr.mxu0 0.0
    %852 = vmatpush2.msra.mxu0 0.0
    %853 = vmatprep.subr.mxu0 0.0
    %854 = vmatpush2.msra.mxu0 0.0
    %855 = vmatprep.subr.mxu0 0.0
    %856 = vmatpush2.msra.mxu0 0.0
    %857 = vmatprep.subr.mxu0 0.0
    %858 = vmatpush2.msra.mxu0 0.0
    %859 = vmatprep.subr.mxu0 0.0
    %860 = vmatpush2.msra.mxu0 0.0
    %861 = vmatprep.subr.mxu0 0.0
    %862 = vmatpush2.msra.mxu0 0.0
    %863 = vmatprep.subr.mxu0 0.0
    %864 = vmatpush2.msra.mxu0 0.0
    %865 = vmatprep.subr.mxu0 0.0
    %866 = vmatpush2.msra.mxu0 0.0
    %867 = vmatprep.subr.mxu0 0.0
    %868 = vmatpush2.msra.mxu0 0.0
    %869 = vmatprep.subr.mxu0 0.0
    %870 = vmatpush2.msra.mxu0 0.0
    %871 = vmatprep.subr.mxu0 0.0
    %872 = vmatpush2.msra.mxu0 0.0
    %873 = vmatprep.subr.mxu0 0.0
    %874 = vmatpush2.msra.mxu0 0.0
    %875 = vmatprep.subr.mxu0 0.0
    %876 = vmatpush2.msra.mxu0 0.0
    %877 = vmatprep.subr.mxu0 0.0
    %878 = vmatpush2.msra.mxu0 0.0
    %879 = vmatprep.subr.mxu0 0.0
    %880 = vmatpush2.msra.mxu0 0.0
    %881 = vmatprep.mubr.f32.mxu0 0.0
    %882 = vmatmul.mubr.f32.gmra.mxu0 %v812
    %v883 = vpop.f32.mrf.mxu0
    %v884 = vadd.f32 0.0, %v883
    %v885 = vpop.f32.mrf.mxu0
    %886 = vmatprep.mubr.f32.mxu0 0.0
    %887 = vmatmul.mubr.f32.gmra.mxu0 %v815
    %v888 = vpop.f32.mrf.mxu0
    %v889 = vadd.f32 0.0, %v888
    %v890 = vpop.f32.mrf.mxu0
    %891 = vdwg.mxu0
    %v893 = vsel %vm44, %v30, 0
    %v896 = vsel %vm44, %v31, 0
    %898 = vmatprep.subr.mxu0 0.0
    %899 = vmatpush1.msra.mxu0 0.0
    %900 = vmatprep.subr.mxu0 0.0
    %901 = vmatpush1.msra.mxu0 0.0
    %902 = vmatprep.subr.mxu0 0.0
    %903 = vmatpush1.msra.mxu0 0.0
    %904 = vmatprep.subr.mxu0 0.0
    %905 = vmatpush1.msra.mxu0 0.0
    %906 = vmatprep.subr.mxu0 0.0
    %907 = vmatpush1.msra.mxu0 0.0
    %908 = vmatprep.subr.mxu0 0.0
    %909 = vmatpush1.msra.mxu0 0.0
    %910 = vmatprep.subr.mxu0 0.0
    %911 = vmatpush1.msra.mxu0 0.0
    %912 = vmatprep.subr.mxu0 0.0
    %913 = vmatpush1.msra.mxu0 0.0
    %914 = vmatprep.subr.mxu0 0.0
    %915 = vmatpush1.msra.mxu0 0.0
    %916 = vmatprep.subr.mxu0 0.0
    %917 = vmatpush1.msra.mxu0 0.0
    %918 = vmatprep.subr.mxu0 0.0
    %919 = vmatpush1.msra.mxu0 0.0
    %920 = vmatprep.subr.mxu0 0.0
    %921 = vmatpush1.msra.mxu0 0.0
    %922 = vmatprep.subr.mxu0 0.0
    %923 = vmatpush1.msra.mxu0 0.0
    %924 = vmatprep.subr.mxu0 0.0
    %925 = vmatpush1.msra.mxu0 0.0
    %926 = vmatprep.subr.mxu0 0.0
    %927 = vmatpush1.msra.mxu0 0.0
    %928 = vmatprep.subr.mxu0 0.0
    %929 = vmatpush1.msra.mxu0 %v808
    %930 = vmatprep.subr.mxu0 0.0
    %931 = vmatpush2.msra.mxu0 0.0
    %932 = vmatprep.subr.mxu0 0.0
    %933 = vmatpush2.msra.mxu0 0.0
    %934 = vmatprep.subr.mxu0 0.0
    %935 = vmatpush2.msra.mxu0 0.0
    %936 = vmatprep.subr.mxu0 0.0
    %937 = vmatpush2.msra.mxu0 0.0
    %938 = vmatprep.subr.mxu0 0.0
    %939 = vmatpush2.msra.mxu0 0.0
    %940 = vmatprep.subr.mxu0 0.0
    %941 = vmatpush2.msra.mxu0 0.0
    %942 = vmatprep.subr.mxu0 0.0
    %943 = vmatpush2.msra.mxu0 0.0
    %944 = vmatprep.subr.mxu0 0.0
    %945 = vmatpush2.msra.mxu0 0.0
    %946 = vmatprep.subr.mxu0 0.0
    %947 = vmatpush2.msra.mxu0 0.0
    %948 = vmatprep.subr.mxu0 0.0
    %949 = vmatpush2.msra.mxu0 0.0
    %950 = vmatprep.subr.mxu0 0.0
    %951 = vmatpush2.msra.mxu0 0.0
    %952 = vmatprep.subr.mxu0 0.0
    %953 = vmatpush2.msra.mxu0 0.0
    %954 = vmatprep.subr.mxu0 0.0
    %955 = vmatpush2.msra.mxu0 0.0
    %956 = vmatprep.subr.mxu0 0.0
    %957 = vmatpush2.msra.mxu0 0.0
    %958 = vmatprep.subr.mxu0 0.0
    %959 = vmatpush2.msra.mxu0 0.0
    %960 = vmatprep.subr.mxu0 0.0
    %961 = vmatpush2.msra.mxu0 0.0
    %962 = vmatprep.mubr.f32.mxu0 0.0
    %963 = vmatmul.mubr.f32.gmra.mxu0 %v893
    %v964 = vpop.f32.mrf.mxu0
    %v965 = vadd.f32 0.0, %v964
    %v966 = vpop.f32.mrf.mxu0
    %967 = vmatprep.mubr.f32.mxu0 0.0
    %968 = vmatmul.mubr.f32.gmra.mxu0 %v896
    %v969 = vpop.f32.mrf.mxu0
    %v970 = vadd.f32 0.0, %v969
    %v971 = vpop.f32.mrf.mxu0
    %972 = vdwg.mxu0
    %v973 = vsel %vm44, %v884, 0.0
    %v974 = vsel %vm44, %v889, 0.0
    %v975 = vadd.f32 %v973, %v974
    %v976 = vsel %vm44, %v965, 0.0
    %v977 = vadd.f32 %v975, %v976
    %v978 = vsel %vm44, %v970, 0.0
    %v979 = vadd.f32 %v977, %v978
    %v980 = vrot.slane %v979, 4
    %v981 = vadd.f32 %v979, %v980
    %v982 = vrot.slane %v981, 2
    %v983 = vadd.f32 %v981, %v982
    %v984 = vrot.slane %v983, 1
    %v985 = vadd.f32 %v983, %v984
    %v986 = vrcp.pop 32.0
    %v987 = vmul.f32 %v985, %v986
    %v988 = vsub.f32 %v884, %v987
    %v989 = vsub.f32 %v889, %v987
    %v990 = vsub.f32 %v965, %v987
    %v991 = vsub.f32 %v970, %v987
    %v992 = vmul.f32 %v988, %v988
    %v993 = vmul.f32 %v989, %v989
    %v994 = vmul.f32 %v990, %v990
    %v995 = vmul.f32 %v991, %v991
    %v996 = vsel %vm44, %v992, 0.0
    %v997 = vsel %vm44, %v993, 0.0
    %v998 = vadd.f32 %v996, %v997
    %v999 = vsel %vm44, %v994, 0.0
    %v1000 = vadd.f32 %v998, %v999
    %v1001 = vsel %vm44, %v995, 0.0
    %v1002 = vadd.f32 %v1000, %v1001
    %v1003 = vrot.slane %v1002, 4
    %v1004 = vadd.f32 %v1002, %v1003
    %v1005 = vrot.slane %v1004, 2
    %v1006 = vadd.f32 %v1004, %v1005
    %v1007 = vrot.slane %v1006, 1
    %v1008 = vadd.f32 %v1006, %v1007
    %v1009 = vmul.f32 %v1008, %v986
    %v1010 = vadd.f32 %v1009, 1e-05
    %v1011 = vrsqrt.pop %v1010
    %v1012 = vmul.f32 %v988, %v1011
    %v1013 = vmul.f32 %v989, %v1011
    %v1014 = vmul.f32 %v990, %v1011
    %v1015 = vmul.f32 %v991, %v1011
    %v1016 = vmax.f32 %v1012, 0.0
    %v1017 = vmax.f32 %v1013, 0.0
    %v1018 = vmax.f32 %v1014, 0.0
    %v1019 = vmax.f32 %v1015, 0.0
    %v1020 = vadd.f32 %v34, %v1016
    %v1021 = vadd.f32 %v35, %v1017
    %v1022 = vadd.f32 %v36, %v1018
    %v1023 = vadd.f32 %v37, %v1019
    %1024 = vst.msk [vmem:[#allocation4] sm:$0xff] %vm44, %v1020
    %1025 = vst.msk [vmem:[#allocation4 + $0x8] sm:$0xff] %vm44, %v1021
    %1026 = vst.msk [vmem:[#allocation4 + $0x10] sm:$0xff] %vm44, %v1022
    %1027 = vst.msk [vmem:[#allocation4 + $0x18] sm:$0xff] %vm44, %v1023
    %v1028 = vld [vmem:[#allocation4] sm:$0x1]
    %v1029 = vld [vmem:[#allocation4 + $0x10] sm:$0x1]
    %v1032 = vrot.slane %v1029, 7
    %vm1033 = vcmask 1041409
    %v1034 = vsel %vm1033, %v1032, %v1028
    %vm1036 = vcmask 58368
    %1037 = vst.msk [vmem:[#allocation5] sm:$0x3] %vm1036, %v1034
    %v1038 = vld [vmem:[#allocation4 + $0x1] sm:$0x1]
    %v1039 = vld [vmem:[#allocation4 + $0x11] sm:$0x1]
    %v1042 = vrot.slane %v1039, 7
    %v1043 = vsel %vm1033, %v1042, %v1038
    %1044 = vrot.lane.b32.xlu0 %v1043, 8
    %v1045 = vpop.permute.xlu0 %1044
    %vm1047 = vcmask 123968
    %1048 = vst.msk [vmem:[#allocation5] sm:$0x3] %vm1047, %v1045
    %v1049 = vld [vmem:[#allocation4 + $0x2] sm:$0x1]
    %v1050 = vld [vmem:[#allocation4 + $0x12] sm:$0x1]
    %v1053 = vrot.slane %v1050, 7
    %v1054 = vsel %vm1033, %v1053, %v1049
    %1055 = vrot.lane.b32.xlu0 %v1054, 16
    %v1056 = vpop.permute.xlu0 %1055
    %vm1058 = vcmask 189568
    %1059 = vst.msk [vmem:[#allocation5] sm:$0x3] %vm1058, %v1056
    %v1060 = vld [vmem:[#allocation4 + $0x3] sm:$0x1]
    %v1061 = vld [vmem:[#allocation4 + $0x13] sm:$0x1]
    %v1064 = vrot.slane %v1061, 7
    %v1065 = vsel %vm1033, %v1064, %v1060
    %1066 = vrot.lane.b32.xlu0 %v1065, 24
    %v1067 = vpop.permute.xlu0 %1066
    %vm1069 = vcmask 255168
    %1070 = vst.msk [vmem:[#allocation5] sm:$0x3] %vm1069, %v1067
    %v1071 = vld [vmem:[#allocation4 + $0x4] sm:$0x1]
    %v1072 = vld [vmem:[#allocation4 + $0x14] sm:$0x1]
    %v1075 = vrot.slane %v1072, 7
    %v1076 = vsel %vm1033, %v1075, %v1071
    %1077 = vrot.lane.b32.xlu0 %v1076, 32
    %v1078 = vpop.permute.xlu0 %1077
    %vm1080 = vcmask 320768
    %1081 = vst.msk [vmem:[#allocation5] sm:$0x3] %vm1080, %v1078
    %v1082 = vld [vmem:[#allocation4 + $0x5] sm:$0x1]
    %v1083 = vld [vmem:[#allocation4 + $0x15] sm:$0x1]
    %v1086 = vrot.slane %v1083, 7
    %v1087 = vsel %vm1033, %v1086, %v1082
    %1088 = vrot.lane.b32.xlu0 %v1087, 40
    %v1089 = vpop.permute.xlu0 %1088
    %vm1091 = vcmask 386368
    %1092 = vst.msk [vmem:[#allocation5] sm:$0x3] %vm1091, %v1089
    %v1093 = vld [vmem:[#allocation4 + $0x6] sm:$0x1]
    %v1094 = vld [vmem:[#allocation4 + $0x16] sm:$0x1]
    %v1097 = vrot.slane %v1094, 7
    %v1098 = vsel %vm1033, %v1097, %v1093
    %1099 = vrot.lane.b32.xlu0 %v1098, 48
    %v1100 = vpop.permute.xlu0 %1099
    %vm1102 = vcmask 451968
    %1103 = vst.msk [vmem:[#allocation5] sm:$0x3] %vm1102, %v1100
    %v1104 = vld [vmem:[#allocation4 + $0x7] sm:$0x1]
    %v1105 = vld [vmem:[#allocation4 + $0x17] sm:$0x1]
    %v1108 = vrot.slane %v1105, 7
    %v1109 = vsel %vm1033, %v1108, %v1104
    %1110 = vrot.lane.b32.xlu0 %v1109, 56
    %v1111 = vpop.permute.xlu0 %1110
    %vm1113 = vcmask 517568
    %1114 = vst.msk [vmem:[#allocation5] sm:$0x3] %vm1113, %v1111
    %v1115 = vld [vmem:[#allocation4 + $0x8] sm:$0x1]
    %v1116 = vld [vmem:[#allocation4 + $0x18] sm:$0x1]
    %v1119 = vrot.slane %v1116, 7
    %v1120 = vsel %vm1033, %v1119, %v1115
    %1121 = vrot.lane.b32.xlu0 %v1120, 64
    %v1122 = vpop.permute.xlu0 %1121
    %vm1124 = vcmask 583168
    %1125 = vst.msk [vmem:[#allocation5] sm:$0x3] %vm1124, %v1122
    %v1126 = vld [vmem:[#allocation4 + $0x9] sm:$0x1]
    %v1127 = vld [vmem:[#allocation4 + $0x19] sm:$0x1]
    %v1130 = vrot.slane %v1127, 7
    %v1131 = vsel %vm1033, %v1130, %v1126
    %1132 = vrot.lane.b32.xlu0 %v1131, 72
    %v1133 = vpop.permute.xlu0 %1132
    %vm1135 = vcmask 648768
    %1136 = vst.msk [vmem:[#allocation5] sm:$0x3] %vm1135, %v1133
    %v1137 = vld [vmem:[#allocation4 + $0xa] sm:$0x1]
    %v1138 = vld [vmem:[#allocation4 + $0x1a] sm:$0x1]
    %v1141 = vrot.slane %v1138, 7
    %v1142 = vsel %vm1033, %v1141, %v1137
    %1143 = vrot.lane.b32.xlu0 %v1142, 80
    %v1144 = vpop.permute.xlu0 %1143
    %vm1146 = vcmask 714368
    %1147 = vst.msk [vmem:[#allocation5] sm:$0x3] %vm1146, %v1144
    %v1148 = vld [vmem:[#allocation4 + $0xb] sm:$0x1]
    %v1149 = vld [vmem:[#allocation4 + $0x1b] sm:$0x1]
    %v1152 = vrot.slane %v1149, 7
    %v1153 = vsel %vm1033, %v1152, %v1148
    %1154 = vrot.lane.b32.xlu0 %v1153, 88
    %v1155 = vpop.permute.xlu0 %1154
    %vm1157 = vcmask 779968
    %1158 = vst.msk [vmem:[#allocation5] sm:$0x3] %vm1157, %v1155
    %v1159 = vld [vmem:[#allocation4 + $0xc] sm:$0x1]
    %v1160 = vld [vmem:[#allocation4 + $0x1c] sm:$0x1]
    %v1163 = vrot.slane %v1160, 7
    %v1164 = vsel %vm1033, %v1163, %v1159
    %1165 = vrot.lane.b32.xlu0 %v1164, 96
    %v1166 = vpop.permute.xlu0 %1165
    %vm1168 = vcmask 845568
    %1169 = vst.msk [vmem:[#allocation5] sm:$0x3] %vm1168, %v1166
    %v1170 = vld [vmem:[#allocation4 + $0xd] sm:$0x1]
    %v1171 = vld [vmem:[#allocation4 + $0x1d] sm:$0x1]
    %v1174 = vrot.slane %v1171, 7
    %v1175 = vsel %vm1033, %v1174, %v1170
    %1176 = vrot.lane.b32.xlu0 %v1175, 104
    %v1177 = vpop.permute.xlu0 %1176
    %vm1179 = vcmask 911168
    %1180 = vst.msk [vmem:[#allocation5] sm:$0x3] %vm1179, %v1177
    %v1181 = vld [vmem:[#allocation4 + $0xe] sm:$0x1]
    %v1182 = vld [vmem:[#allocation4 + $0x1e] sm:$0x1]
    %v1185 = vrot.slane %v1182, 7
    %v1186 = vsel %vm1033, %v1185, %v1181
    %1187 = vrot.lane.b32.xlu0 %v1186, 112
    %v1188 = vpop.permute.xlu0 %1187
    %vm1190 = vcmask 976768
    %1191 = vst.msk [vmem:[#allocation5] sm:$0x3] %vm1190, %v1188
    %v1192 = vld [vmem:[#allocation4 + $0xf] sm:$0x1]
    %v1193 = vld [vmem:[#allocation4 + $0x1f] sm:$0x1]
    %v1196 = vrot.slane %v1193, 7
    %v1197 = vsel %vm1033, %v1196, %v1192
    %1198 = vrot.lane.b32.xlu0 %v1197, 120
    %v1199 = vpop.permute.xlu0 %1198
    %vm1201 = vcmask 1042368
    %1202 = vst.msk [vmem:[#allocation5] sm:$0x3] %vm1201, %v1199
    // Predicated region
    $region30: #{tpu_custom_call.1} parent=1 // pred_check
      _
    $region31: #{tpu_custom_call.1} parent=1 // pred_check_branch
      %1204 = sbr.rel (0) target = $region33
    $region32: #{tpu_custom_call.1} parent=1 // pred_region
      %s1206 = ssub.s32 32, 32
      %1207 = vsyncadd [#allocation6], %s1206
      %s1209 = sshll.u32 [#allocation5], 4
      %s1210 = int_to_ptr.vmem [resolvable:$true] %s1209
      %1212 = dma.vmem_to_hbm [thread:$0]  %s1210, 32, %s7, [#allocation6]
    $region33: #{tpu_custom_call.1} parent=1 // pred_fallthru
      _
    // Predicated region
    $region34: #{tpu_custom_call.1} parent=1 // pred_check
      _
    $region35: #{tpu_custom_call.1} parent=1 // pred_check_branch
      %1214 = sbr.rel (0) target = $region37
    $region36: #{tpu_custom_call.1} parent=1 // pred_region
      %1215 = dma.done [#allocation6], 32
    $region37: #{tpu_custom_call.1} parent=1 // pred_fallthru
      _
    %1216 = vsyncpa [#allocation6], 1

</llo_original>
